<compile_context>
chip_gen: v7x
topology: tpu7x:2x2x1
jax: 0.10.0
libtpu: 0.0.40
codegen_flags: <defaults>
</compile_context>

<pallas_src>
import math

import jax
import jax.numpy as jnp
from jax.experimental import pallas as pl
from jax.experimental.pallas import tpu as pltpu


def _round_up(x, m):
    return (x + m - 1) // m * m


# ----------------------------------------------------------------------------
# Kernels
# ----------------------------------------------------------------------------
def conv_relu_pool_kernel(p_ref, w_ref, b_ref, o_ref):
    """Fused conv (GEMM over im2col patches) + bias + ReLU + 2x2 max-pool.

    p_ref: (4, TM, Kp)  bf16 -- patches for the 4 conv positions of each 2x2 window
    w_ref: (Kp, Cp)     bf16 -- flattened conv weights, zero-padded
    b_ref: (1, Cp)      f32
    o_ref: (TM, Cp)     bf16 -- max over the 2x2 window of relu(conv)
    """
    four, tm, kp = p_ref.shape
    # Single long MXU pass over all 4 pool positions (amortizes fill/drain).
    p = p_ref[...].reshape(four * tm, kp)
    acc = jnp.dot(p, w_ref[...], preferred_element_type=jnp.float32)  # (4*TM, Cp)
    # Max over the 4 pool-window positions (tile-aligned static row slices).
    r = acc[0:tm]
    for idx in range(1, four):
        r = jnp.maximum(r, acc[idx * tm:(idx + 1) * tm])
    r = jnp.maximum(r + b_ref[...], 0.0)
    o_ref[...] = r.astype(o_ref.dtype)


def linear_kernel(x_ref, w_ref, b_ref, o_ref):
    """y = x @ W^T + b  (W already passed transposed and padded as (Kp, Cp))."""
    o_ref[...] = (
        jnp.dot(x_ref[...], w_ref[...], preferred_element_type=jnp.float32)
        + b_ref[...]
    ).astype(o_ref.dtype)


# ----------------------------------------------------------------------------
# Wrappers (plain-JAX glue around pallas_call)
# ----------------------------------------------------------------------------
def _build_pool_patches(x_nhwc, KH, KW, Kp, dtype=jnp.bfloat16):
    """Build im2col patches directly in (4, M, Kp) layout via strided slices.

    patch[ph*2+pw, n*Hp*Wp + hp*Wp + wp, (kh*KW+kw)*Cin + c]
        = x[n, 2*hp+ph+kh, 2*wp+pw+kw, c]
    Zero-pads the K axis up to Kp in the same single concatenate pass.
    """
    N, H, W, Cin = x_nhwc.shape
    Ho, Wo = H - KH + 1, W - KW + 1
    Hp, Wp = Ho // 2, Wo // 2
    K = KH * KW * Cin
    x = x_nhwc.astype(dtype)

    pos_list = []
    for ph in range(2):
        for pw in range(2):
            cols = []
            for kh in range(KH):
                for kw in range(KW):
                    cols.append(
                        x[:, ph + kh: ph + kh + 2 * Hp: 2,
                          pw + kw: pw + kw + 2 * Wp: 2, :])
            if Kp > K:
                cols.append(jnp.zeros((N, Hp, Wp, Kp - K), dtype))
            pos_list.append(
                jnp.concatenate(cols, axis=-1).reshape(N * Hp * Wp, Kp))
    patches = jnp.stack(pos_list, axis=0)  # (4, M, Kp)
    return patches, (N, Hp, Wp)


def conv_relu_pool(x_nhwc, w_oihw, b, *, tm=512, lane=128):
    """VALID 5x5 conv + ReLU + 2x2/2 max-pool.  Input/output are NHWC."""
    N, H, W, Cin = x_nhwc.shape
    Cout, Cin_w, KH, KW = w_oihw.shape
    assert Cin == Cin_w
    K = KH * KW * Cin
    Kp = _round_up(K, 128)            # lane-aligned contraction dim
    Cp = _round_up(Cout, lane)        # lane-dense output channels

    patches, (N, Hp, Wp) = _build_pool_patches(x_nhwc, KH, KW, Kp)
    M = N * Hp * Wp
    tm_eff = min(tm, _round_up(M, 16))           # bf16 sublane packing
    Mp = _round_up(M, tm_eff)
    if Mp > M:
        patches = jnp.pad(patches, ((0, 0), (0, Mp - M), (0, 0)))

    # (Kp, Cp) weight matrix matching the (kh, kw, cin) patch ordering.
    w_mat = jnp.transpose(w_oihw, (2, 3, 1, 0)).reshape(K, Cout)
    w_mat = jnp.pad(w_mat, ((0, Kp - K), (0, Cp - Cout))).astype(jnp.bfloat16)
    b_mat = jnp.pad(b.reshape(1, Cout).astype(jnp.float32),
                    ((0, 0), (0, Cp - Cout)))

    grid = (Mp // tm_eff,)
    out = pl.pallas_call(
        conv_relu_pool_kernel,
        out_shape=jax.ShapeDtypeStruct((Mp, Cp), jnp.bfloat16),
        grid_spec=pltpu.PrefetchScalarGridSpec(
            num_scalar_prefetch=0,
            grid=grid,
            in_specs=[
                pl.BlockSpec((4, tm_eff, Kp), lambda i: (0, i, 0)),
                pl.BlockSpec((Kp, Cp), lambda i: (0, 0)),
                pl.BlockSpec((1, Cp), lambda i: (0, 0)),
            ],
            out_specs=pl.BlockSpec((tm_eff, Cp), lambda i: (i, 0)),
        ),
        compiler_params=pltpu.CompilerParams(
            dimension_semantics=("parallel",)),
    )(patches, w_mat, b_mat)

    return out[:M, :Cout].reshape(N, Hp, Wp, Cout)  # NHWC pooled activation (bf16)


def linear(x, w, b, *, tn=512, lane=128):
    """PyTorch F.linear: x (N, K) f32, w (C, K), b (C,) -> (N, C) f32."""
    N, K = x.shape
    C = w.shape[0]
    Kp = _round_up(K, 128)
    Cp = _round_up(C, lane)
    tn_eff = min(tn, _round_up(N, 8))
    Np = _round_up(N, tn_eff)

    x_p = jnp.pad(x, ((0, Np - N), (0, Kp - K)))
    w_t = jnp.pad(w.T, ((0, Kp - K), (0, Cp - C)))
    b_p = jnp.pad(b.reshape(1, C), ((0, 0), (0, Cp - C)))

    out = pl.pallas_call(
        linear_kernel,
        out_shape=jax.ShapeDtypeStruct((Np, Cp), jnp.float32),
        grid=(Np // tn_eff,),
        in_specs=[
            pl.BlockSpec((tn_eff, Kp), lambda i: (i, 0)),
            pl.BlockSpec((Kp, Cp), lambda i: (0, 0)),
            pl.BlockSpec((1, Cp), lambda i: (0, 0)),
        ],
        out_specs=pl.BlockSpec((tn_eff, Cp), lambda i: (i, 0)),
        compiler_params=pltpu.CompilerParams(
            dimension_semantics=("parallel",)),
    )(x_p, w_t, b_p)
    return out[:N, :C]


def fjord_femnist_cnn2_forward(x_nchw, params):
    """Forward pass of FjordFemnistCNN2 with p=1 (full model). Input is NCHW."""
    w1, b1, w2, b2, wf, bf = params
    # NCHW -> NHWC once on the (small) network input; everything downstream
    # stays channels-last so no further activation transposes are needed.
    x = jnp.transpose(x_nchw, (0, 2, 3, 1))
    y = conv_relu_pool(x, w1, b1)                    # (N, 12, 12, 10) bf16
    y = conv_relu_pool(y, w2, b2)                    # (N, 4, 4, 20)  bf16
    N, Hh, Ww, Cc = y.shape
    # PyTorch flattens in NCHW order; fold the permutation into the (tiny) fc
    # weight ((c,h,w)-ordered columns -> (h,w,c)-ordered) instead of
    # transposing the activation back through HBM.
    num_classes = wf.shape[0]
    wf_hwc = wf.reshape(num_classes, Cc, Hh, Ww).transpose(0, 2, 3, 1)
    wf_hwc = wf_hwc.reshape(num_classes, Cc * Hh * Ww)
    y_flat = y.reshape(N, Hh * Ww * Cc).astype(jnp.float32)
    return linear(y_flat, wf_hwc, bf)                # (N, num_classes)


# ----------------------------------------------------------------------------
# Pure-JAX reference (for correctness check only)
# ----------------------------------------------------------------------------
def reference_forward(x_nchw, params):
    w1, b1, w2, b2, wf, bf = params
    hp = jax.lax.Precision.HIGHEST

    def conv_block(y, w, b):
        y = jax.lax.conv_general_dilated(
            y, w, (1, 1), "VALID",
            dimension_numbers=("NCHW", "OIHW", "NCHW"), precision=hp)
        y = y + b[None, :, None, None]
        y = jnp.maximum(y, 0.0)
        return jax.lax.reduce_window(
            y, -jnp.inf, jax.lax.max, (1, 1, 2, 2), (1, 1, 2, 2), "VALID")

    y = conv_block(x_nchw, w1, b1)
    y = conv_block(y, w2, b2)
    y = y.reshape(y.shape[0], -1)
    return jnp.dot(y, wf.T, precision=hp) + bf


# ----------------------------------------------------------------------------
# Main
# ----------------------------------------------------------------------------
def init_params(key, num_classes):
    """Deterministic PyTorch-default-style uniform init."""
    ks = jax.random.split(key, 6)

    def u(k, shape, fan_in):
        bound = 1.0 / math.sqrt(fan_in)
        return jax.random.uniform(k, shape, jnp.float32, -bound, bound)

    w1 = u(ks[0], (10, 3, 5, 5), 3 * 5 * 5)
    b1 = u(ks[1], (10,), 3 * 5 * 5)
    w2 = u(ks[2], (20, 10, 5, 5), 10 * 5 * 5)
    b2 = u(ks[3], (20,), 10 * 5 * 5)
    wf = u(ks[4], (num_classes, 20 * 4 * 4), 20 * 4 * 4)
    bf = u(ks[5], (num_classes,), 20 * 4 * 4)
    return (w1, b1, w2, b2, wf, bf)


if __name__ == "__main__":
    num_classes = 10
    key = jax.random.PRNGKey(0)
    k_x, k_p = jax.random.split(key)

    # Architecture requires 28x28 spatial input (-> 24 -> 12 -> 8 -> 4).
    x = jax.random.normal(k_x, (2, 3, 28, 28), dtype=jnp.float32)
    params = init_params(k_p, num_classes)

    fwd = jax.jit(fjord_femnist_cnn2_forward)
    out = fwd(x, params)
    out = jax.block_until_ready(out)

    ref = reference_forward(x, params)
    assert out.shape == (2, num_classes), out.shape
    max_err = float(jnp.max(jnp.abs(out - ref)))
    assert max_err < 2e-2, f"max abs err {max_err}"
    print("KERNEL_OK")
</pallas_src>

<mosaic_0001>
module attributes {stable_mosaic.version = 11 : i64} {
  func.func @conv_relu_pool_kernel(%arg0: i32, %arg1: memref<4x288x128xbf16, #tpu.memory_space<vmem>>, %arg2: memref<128x128xbf16, #tpu.memory_space<vmem>>, %arg3: memref<1x128xf32, #tpu.memory_space<vmem>>, %arg4: memref<288x128xbf16, #tpu.memory_space<vmem>>) attributes {dimension_semantics = [#tpu.dimension_semantics<parallel>], iteration_bounds = array<i64: 1>, scalar_prefetch = 0 : i64, scratch_operands = 0 : i64, tpu.core_type = #tpu.core_type<tc>, window_params = [{transform_indices = @transform_0, window_bounds = array<i64: 4, 288, 128>}, {pipeline_mode = #tpu.pipeline_mode<synchronous>, transform_indices = @transform_1, window_bounds = array<i64: 128, 128>}, {pipeline_mode = #tpu.pipeline_mode<synchronous>, transform_indices = @transform_2, window_bounds = array<i64: 1, 128>}, {transform_indices = @transform_3, window_bounds = array<i64: 288, 128>}]} {
    %c0 = arith.constant 0 : index
    %c0_0 = arith.constant 0 : index
    %c0_1 = arith.constant 0 : index
    %0 = vector.load %arg1[%c0, %c0_0, %c0_1] : memref<4x288x128xbf16, #tpu.memory_space<vmem>>, vector<4x288x128xbf16>
    %1 = vector.shape_cast %0 : vector<4x288x128xbf16> to vector<1152x128xbf16>
    %c0_2 = arith.constant 0 : index
    %c0_3 = arith.constant 0 : index
    %2 = vector.load %arg2[%c0_2, %c0_3] : memref<128x128xbf16, #tpu.memory_space<vmem>>, vector<128x128xbf16>
    %cst = arith.constant dense<0.000000e+00> : vector<1152x128xf32>
    %3 = tpu.matmul %1, %2, %cst {dimension_numbers = #tpu.dot_dimension_numbers<[1], [0], [0], [1], [0, 0, 1, 1], [], []>} : vector<1152x128xbf16>, vector<128x128xbf16>, vector<1152x128xf32> -> vector<1152x128xf32>
    %4 = vector.extract_strided_slice %3 {offsets = [0, 0], sizes = [288, 128], strides = [1, 1]} : vector<1152x128xf32> to vector<288x128xf32>
    %5 = vector.extract_strided_slice %3 {offsets = [288, 0], sizes = [288, 128], strides = [1, 1]} : vector<1152x128xf32> to vector<288x128xf32>
    %6 = arith.maximumf %4, %5 : vector<288x128xf32>
    %7 = vector.extract_strided_slice %3 {offsets = [576, 0], sizes = [288, 128], strides = [1, 1]} : vector<1152x128xf32> to vector<288x128xf32>
    %8 = arith.maximumf %6, %7 : vector<288x128xf32>
    %9 = vector.extract_strided_slice %3 {offsets = [864, 0], sizes = [288, 128], strides = [1, 1]} : vector<1152x128xf32> to vector<288x128xf32>
    %10 = arith.maximumf %8, %9 : vector<288x128xf32>
    %c0_4 = arith.constant 0 : index
    %c0_5 = arith.constant 0 : index
    %11 = vector.load %arg3[%c0_4, %c0_5] : memref<1x128xf32, #tpu.memory_space<vmem>>, vector<1x128xf32>
    %12 = vector.broadcast %11 : vector<1x128xf32> to vector<288x128xf32>
    %13 = arith.addf %10, %12 : vector<288x128xf32>
    %cst_6 = arith.constant 0.000000e+00 : f32
    %14 = vector.broadcast %cst_6 : f32 to vector<288x128xf32>
    %15 = arith.maximumf %13, %14 : vector<288x128xf32>
    %16 = arith.truncf %15 : vector<288x128xf32> to vector<288x128xbf16>
    %c0_7 = arith.constant 0 : index
    %c0_8 = arith.constant 0 : index
    %17 = vector.load %arg4[%c0_7, %c0_8] : memref<288x128xbf16, #tpu.memory_space<vmem>>, vector<288x128xbf16>
    tpu.vector_store %arg4[%c0_7, %c0_8], %16 {strides = array<i32>} : memref<288x128xbf16, #tpu.memory_space<vmem>>, vector<288x128xbf16>,
    return
  }
  func.func @transform_0(%arg0: i32) -> (i32, i32, i32) {
    %c0_i32 = arith.constant 0 : i32
    %c0_i32_0 = arith.constant 0 : i32
    %c0_i32_1 = arith.constant 0 : i32
    return %c0_i32, %arg0, %c0_i32_0 : i32, i32, i32
  }
  func.func @transform_1(%arg0: i32) -> (i32, i32) {
    %c0_i32 = arith.constant 0 : i32
    %c0_i32_0 = arith.constant 0 : i32
    %c0_i32_1 = arith.constant 0 : i32
    return %c0_i32, %c0_i32_0 : i32, i32
  }
  func.func @transform_2(%arg0: i32) -> (i32, i32) {
    %c0_i32 = arith.constant 0 : i32
    %c0_i32_0 = arith.constant 0 : i32
    %c0_i32_1 = arith.constant 0 : i32
    return %c0_i32, %c0_i32_0 : i32, i32
  }
  func.func @transform_3(%arg0: i32) -> (i32, i32) {
    %c0_i32 = arith.constant 0 : i32
    %c0_i32_0 = arith.constant 0 : i32
    return %arg0, %c0_i32 : i32, i32
  }
}

module attributes {stable_mosaic.version = 11 : i64} {
  func.func @conv_relu_pool_kernel(%arg0: i32, %arg1: memref<4x32x256xbf16, #tpu.memory_space<vmem>>, %arg2: memref<256x128xbf16, #tpu.memory_space<vmem>>, %arg3: memref<1x128xf32, #tpu.memory_space<vmem>>, %arg4: memref<32x128xbf16, #tpu.memory_space<vmem>>) attributes {dimension_semantics = [#tpu.dimension_semantics<parallel>], iteration_bounds = array<i64: 1>, scalar_prefetch = 0 : i64, scratch_operands = 0 : i64, tpu.core_type = #tpu.core_type<tc>, window_params = [{transform_indices = @transform_0, window_bounds = array<i64: 4, 32, 256>}, {pipeline_mode = #tpu.pipeline_mode<synchronous>, transform_indices = @transform_1, window_bounds = array<i64: 256, 128>}, {pipeline_mode = #tpu.pipeline_mode<synchronous>, transform_indices = @transform_2, window_bounds = array<i64: 1, 128>}, {transform_indices = @transform_3, window_bounds = array<i64: 32, 128>}]} {
    %c0 = arith.constant 0 : index
    %c0_0 = arith.constant 0 : index
    %c0_1 = arith.constant 0 : index
    %0 = vector.load %arg1[%c0, %c0_0, %c0_1] : memref<4x32x256xbf16, #tpu.memory_space<vmem>>, vector<4x32x256xbf16>
    %1 = vector.shape_cast %0 : vector<4x32x256xbf16> to vector<128x256xbf16>
    %c0_2 = arith.constant 0 : index
    %c0_3 = arith.constant 0 : index
    %2 = vector.load %arg2[%c0_2, %c0_3] : memref<256x128xbf16, #tpu.memory_space<vmem>>, vector<256x128xbf16>
    %cst = arith.constant dense<0.000000e+00> : vector<128x128xf32>
    %3 = tpu.matmul %1, %2, %cst {dimension_numbers = #tpu.dot_dimension_numbers<[1], [0], [0], [1], [0, 0, 1, 1], [], []>} : vector<128x256xbf16>, vector<256x128xbf16>, vector<128x128xf32> -> vector<128x128xf32>
    %4 = vector.extract_strided_slice %3 {offsets = [0, 0], sizes = [32, 128], strides = [1, 1]} : vector<128x128xf32> to vector<32x128xf32>
    %5 = vector.extract_strided_slice %3 {offsets = [32, 0], sizes = [32, 128], strides = [1, 1]} : vector<128x128xf32> to vector<32x128xf32>
    %6 = arith.maximumf %4, %5 : vector<32x128xf32>
    %7 = vector.extract_strided_slice %3 {offsets = [64, 0], sizes = [32, 128], strides = [1, 1]} : vector<128x128xf32> to vector<32x128xf32>
    %8 = arith.maximumf %6, %7 : vector<32x128xf32>
    %9 = vector.extract_strided_slice %3 {offsets = [96, 0], sizes = [32, 128], strides = [1, 1]} : vector<128x128xf32> to vector<32x128xf32>
    %10 = arith.maximumf %8, %9 : vector<32x128xf32>
    %c0_4 = arith.constant 0 : index
    %c0_5 = arith.constant 0 : index
    %11 = vector.load %arg3[%c0_4, %c0_5] : memref<1x128xf32, #tpu.memory_space<vmem>>, vector<1x128xf32>
    %12 = vector.broadcast %11 : vector<1x128xf32> to vector<32x128xf32>
    %13 = arith.addf %10, %12 : vector<32x128xf32>
    %cst_6 = arith.constant 0.000000e+00 : f32
    %14 = vector.broadcast %cst_6 : f32 to vector<32x128xf32>
    %15 = arith.maximumf %13, %14 : vector<32x128xf32>
    %16 = arith.truncf %15 : vector<32x128xf32> to vector<32x128xbf16>
    %c0_7 = arith.constant 0 : index
    %c0_8 = arith.constant 0 : index
    %17 = vector.load %arg4[%c0_7, %c0_8] : memref<32x128xbf16, #tpu.memory_space<vmem>>, vector<32x128xbf16>
    tpu.vector_store %arg4[%c0_7, %c0_8], %16 {strides = array<i32>} : memref<32x128xbf16, #tpu.memory_space<vmem>>, vector<32x128xbf16>,
    return
  }
  func.func @transform_0(%arg0: i32) -> (i32, i32, i32) {
    %c0_i32 = arith.constant 0 : i32
    %c0_i32_0 = arith.constant 0 : i32
    %c0_i32_1 = arith.constant 0 : i32
    return %c0_i32, %arg0, %c0_i32_0 : i32, i32, i32
  }
  func.func @transform_1(%arg0: i32) -> (i32, i32) {
    %c0_i32 = arith.constant 0 : i32
    %c0_i32_0 = arith.constant 0 : i32
    %c0_i32_1 = arith.constant 0 : i32
    return %c0_i32, %c0_i32_0 : i32, i32
  }
  func.func @transform_2(%arg0: i32) -> (i32, i32) {
    %c0_i32 = arith.constant 0 : i32
    %c0_i32_0 = arith.constant 0 : i32
    %c0_i32_1 = arith.constant 0 : i32
    return %c0_i32, %c0_i32_0 : i32, i32
  }
  func.func @transform_3(%arg0: i32) -> (i32, i32) {
    %c0_i32 = arith.constant 0 : i32
    %c0_i32_0 = arith.constant 0 : i32
    return %arg0, %c0_i32 : i32, i32
  }
}

module attributes {stable_mosaic.version = 11 : i64} {
  func.func @linear_kernel(%arg0: i32, %arg1: memref<8x384xf32, #tpu.memory_space<vmem>>, %arg2: memref<384x128xf32, #tpu.memory_space<vmem>>, %arg3: memref<1x128xf32, #tpu.memory_space<vmem>>, %arg4: memref<8x128xf32, #tpu.memory_space<vmem>>) attributes {dimension_semantics = [#tpu.dimension_semantics<parallel>], iteration_bounds = array<i64: 1>, scalar_prefetch = 0 : i64, scratch_operands = 0 : i64, tpu.core_type = #tpu.core_type<tc>, window_params = [{transform_indices = @transform_0, window_bounds = array<i64: 8, 384>}, {pipeline_mode = #tpu.pipeline_mode<synchronous>, transform_indices = @transform_1, window_bounds = array<i64: 384, 128>}, {pipeline_mode = #tpu.pipeline_mode<synchronous>, transform_indices = @transform_2, window_bounds = array<i64: 1, 128>}, {transform_indices = @transform_3, window_bounds = array<i64: 8, 128>}]} {
    %c0 = arith.constant 0 : index
    %c0_0 = arith.constant 0 : index
    %0 = vector.load %arg1[%c0, %c0_0] : memref<8x384xf32, #tpu.memory_space<vmem>>, vector<8x384xf32>
    %c0_1 = arith.constant 0 : index
    %c0_2 = arith.constant 0 : index
    %1 = vector.load %arg2[%c0_1, %c0_2] : memref<384x128xf32, #tpu.memory_space<vmem>>, vector<384x128xf32>
    %cst = arith.constant dense<0.000000e+00> : vector<8x128xf32>
    %2 = tpu.matmul %0, %1, %cst {dimension_numbers = #tpu.dot_dimension_numbers<[1], [0], [0], [1], [0, 0, 1, 1], [], []>} : vector<8x384xf32>, vector<384x128xf32>, vector<8x128xf32> -> vector<8x128xf32>
    %c0_3 = arith.constant 0 : index
    %c0_4 = arith.constant 0 : index
    %3 = vector.load %arg3[%c0_3, %c0_4] : memref<1x128xf32, #tpu.memory_space<vmem>>, vector<1x128xf32>
    %4 = vector.broadcast %3 : vector<1x128xf32> to vector<8x128xf32>
    %5 = arith.addf %2, %4 : vector<8x128xf32>
    %c0_5 = arith.constant 0 : index
    %c0_6 = arith.constant 0 : index
    %6 = vector.load %arg4[%c0_5, %c0_6] : memref<8x128xf32, #tpu.memory_space<vmem>>, vector<8x128xf32>
    tpu.vector_store %arg4[%c0_5, %c0_6], %5 {strides = array<i32>} : memref<8x128xf32, #tpu.memory_space<vmem>>, vector<8x128xf32>,
    return
  }
  func.func @transform_0(%arg0: i32) -> (i32, i32) {
    %c0_i32 = arith.constant 0 : i32
    %c0_i32_0 = arith.constant 0 : i32
    return %arg0, %c0_i32 : i32, i32
  }
  func.func @transform_1(%arg0: i32) -> (i32, i32) {
    %c0_i32 = arith.constant 0 : i32
    %c0_i32_0 = arith.constant 0 : i32
    %c0_i32_1 = arith.constant 0 : i32
    return %c0_i32, %c0_i32_0 : i32, i32
  }
  func.func @transform_2(%arg0: i32) -> (i32, i32) {
    %c0_i32 = arith.constant 0 : i32
    %c0_i32_0 = arith.constant 0 : i32
    %c0_i32_1 = arith.constant 0 : i32
    return %c0_i32, %c0_i32_0 : i32, i32
  }
  func.func @transform_3(%arg0: i32) -> (i32, i32) {
    %c0_i32 = arith.constant 0 : i32
    %c0_i32_0 = arith.constant 0 : i32
    return %arg0, %c0_i32 : i32, i32
  }
}

</mosaic_0001>

<llo_original>
// kernel: fjord_femnist_cnn2_forward.3
$region0: #{fjord_femnist_cnn2_forward.3}
  #allocation0 [shape = 'u32[]', space=smem, size = 0x4, offset = 0x4, fixed_abs, tag = 'smem constant byte address 0x4 - core index']
  #allocation1 [shape = 'u32[144,128]{1,0:T(1,128)}', space=vmem, size = 0x12000, scoped, tag = 'internal scratch']
  %s0 = inlined_call_operand.vmem [shape: bf16[4,288,128], index: 0, kind: input, shape index: {}]
  %s1 = inlined_call_operand.vmem [shape: bf16[128,128], index: 1, kind: input, shape index: {}]
  %s2 = inlined_call_operand.vmem [shape: f32[1,128], index: 2, kind: input, shape index: {}]
  %s3 = inlined_call_operand.vmem [shape: bf16[288,128], index: 3, kind: output, shape index: {}]
  %s4 = sld [smem:[#allocation0]]
  $region22: #{fjord_femnist_cnn2_forward.3} parent=0
    _
  %s6 = ssub.s32 1, %s4
  %s7 = scalar_select 0, %s6, %s4
  // Predicated region
  $region2: #{fjord_femnist_cnn2_forward.3} parent=0 // pred_check
    _
  $region3: #{fjord_femnist_cnn2_forward.3} parent=0 // pred_check_branch
    %9 = sbr.rel (0) target = $region5
  $region4: #{fjord_femnist_cnn2_forward.3} parent=0 // pred_region
    _
  $region5: #{fjord_femnist_cnn2_forward.3} parent=0 // pred_fallthru
    _
  // Predicated region
  $region6: #{fjord_femnist_cnn2_forward.3} parent=0 // pred_check
    _
  $region7: #{fjord_femnist_cnn2_forward.3} parent=0 // pred_check_branch
    %11 = sbr.rel (0) target = $region9
  $region8: #{fjord_femnist_cnn2_forward.3} parent=0 // pred_region
    _
  $region9: #{fjord_femnist_cnn2_forward.3} parent=0 // pred_fallthru
    _
  // Predicated region
  $region10: #{fjord_femnist_cnn2_forward.3} parent=0 // pred_check
    _
  $region11: #{fjord_femnist_cnn2_forward.3} parent=0 // pred_check_branch
    %13 = sbr.rel (0) target = $region13
  $region12: #{fjord_femnist_cnn2_forward.3} parent=0 // pred_region
    _
  $region13: #{fjord_femnist_cnn2_forward.3} parent=0 // pred_fallthru
    _
  %v15 = vld [vmem:[%s0] sm:$0xf]
  %v16 = vld [vmem:[%s0 + $0x4] sm:$0xf]
  %v17 = vld [vmem:[%s0 + $0x8] sm:$0xf]
  %v18 = vld [vmem:[%s0 + $0xc] sm:$0xf]
  %v19 = vld [vmem:[%s0 + $0x10] sm:$0xf]
  %v20 = vld [vmem:[%s0 + $0x14] sm:$0xf]
  %v21 = vld [vmem:[%s0 + $0x18] sm:$0xf]
  %v22 = vld [vmem:[%s0 + $0x1c] sm:$0xf]
  %v23 = vld [vmem:[%s0 + $0x20] sm:$0xf]
  %v24 = vld [vmem:[%s0 + $0x24] sm:$0xf]
  %v25 = vld [vmem:[%s0 + $0x28] sm:$0xf]
  %v26 = vld [vmem:[%s0 + $0x2c] sm:$0xf]
  %v27 = vld [vmem:[%s0 + $0x30] sm:$0xf]
  %v28 = vld [vmem:[%s0 + $0x34] sm:$0xf]
  %v29 = vld [vmem:[%s0 + $0x38] sm:$0xf]
  %v30 = vld [vmem:[%s0 + $0x3c] sm:$0xf]
  %v31 = vld [vmem:[%s0 + $0x40] sm:$0xf]
  %v32 = vld [vmem:[%s0 + $0x44] sm:$0xf]
  %v33 = vld [vmem:[%s0 + $0x48] sm:$0xf]
  %v34 = vld [vmem:[%s0 + $0x4c] sm:$0xf]
  %v35 = vld [vmem:[%s0 + $0x50] sm:$0xf]
  %v36 = vld [vmem:[%s0 + $0x54] sm:$0xf]
  %v37 = vld [vmem:[%s0 + $0x58] sm:$0xf]
  %v38 = vld [vmem:[%s0 + $0x5c] sm:$0xf]
  %v39 = vld [vmem:[%s0 + $0x60] sm:$0xf]
  %v40 = vld [vmem:[%s0 + $0x64] sm:$0xf]
  %v41 = vld [vmem:[%s0 + $0x68] sm:$0xf]
  %v42 = vld [vmem:[%s0 + $0x6c] sm:$0xf]
  %v43 = vld [vmem:[%s0 + $0x70] sm:$0xf]
  %v44 = vld [vmem:[%s0 + $0x74] sm:$0xf]
  %v45 = vld [vmem:[%s0 + $0x78] sm:$0xf]
  %v46 = vld [vmem:[%s0 + $0x7c] sm:$0xf]
  %v47 = vld [vmem:[%s0 + $0x80] sm:$0xf]
  %v48 = vld [vmem:[%s0 + $0x84] sm:$0xf]
  %v49 = vld [vmem:[%s0 + $0x88] sm:$0xf]
  %v50 = vld [vmem:[%s0 + $0x8c] sm:$0xf]
  %v51 = vld [vmem:[%s0 + $0x90] sm:$0xf]
  %v52 = vld [vmem:[%s0 + $0x94] sm:$0xf]
  %v53 = vld [vmem:[%s0 + $0x98] sm:$0xf]
  %v54 = vld [vmem:[%s0 + $0x9c] sm:$0xf]
  %v55 = vld [vmem:[%s0 + $0xa0] sm:$0xf]
  %v56 = vld [vmem:[%s0 + $0xa4] sm:$0xf]
  %v57 = vld [vmem:[%s0 + $0xa8] sm:$0xf]
  %v58 = vld [vmem:[%s0 + $0xac] sm:$0xf]
  %v59 = vld [vmem:[%s0 + $0xb0] sm:$0xf]
  %v60 = vld [vmem:[%s0 + $0xb4] sm:$0xf]
  %v61 = vld [vmem:[%s0 + $0xb8] sm:$0xf]
  %v62 = vld [vmem:[%s0 + $0xbc] sm:$0xf]
  %v63 = vld [vmem:[%s0 + $0xc0] sm:$0xf]
  %v64 = vld [vmem:[%s0 + $0xc4] sm:$0xf]
  %v65 = vld [vmem:[%s0 + $0xc8] sm:$0xf]
  %v66 = vld [vmem:[%s0 + $0xcc] sm:$0xf]
  %v67 = vld [vmem:[%s0 + $0xd0] sm:$0xf]
  %v68 = vld [vmem:[%s0 + $0xd4] sm:$0xf]
  %v69 = vld [vmem:[%s0 + $0xd8] sm:$0xf]
  %v70 = vld [vmem:[%s0 + $0xdc] sm:$0xf]
  %v71 = vld [vmem:[%s0 + $0xe0] sm:$0xf]
  %v72 = vld [vmem:[%s0 + $0xe4] sm:$0xf]
  %v73 = vld [vmem:[%s0 + $0xe8] sm:$0xf]
  %v74 = vld [vmem:[%s0 + $0xec] sm:$0xf]
  %v75 = vld [vmem:[%s0 + $0xf0] sm:$0xf]
  %v76 = vld [vmem:[%s0 + $0xf4] sm:$0xf]
  %v77 = vld [vmem:[%s0 + $0xf8] sm:$0xf]
  %v78 = vld [vmem:[%s0 + $0xfc] sm:$0xf]
  %v79 = vld [vmem:[%s0 + $0x100] sm:$0xf]
  %v80 = vld [vmem:[%s0 + $0x104] sm:$0xf]
  %v81 = vld [vmem:[%s0 + $0x108] sm:$0xf]
  %v82 = vld [vmem:[%s0 + $0x10c] sm:$0xf]
  %v83 = vld [vmem:[%s0 + $0x110] sm:$0xf]
  %v84 = vld [vmem:[%s0 + $0x114] sm:$0xf]
  %v85 = vld [vmem:[%s0 + $0x118] sm:$0xf]
  %v86 = vld [vmem:[%s0 + $0x11c] sm:$0xf]
  %v87 = vld [vmem:[%s0 + $0x120] sm:$0xf]
  %v88 = vld [vmem:[%s0 + $0x124] sm:$0xf]
  %v89 = vld [vmem:[%s0 + $0x128] sm:$0xf]
  %v90 = vld [vmem:[%s0 + $0x12c] sm:$0xf]
  %v91 = vld [vmem:[%s0 + $0x130] sm:$0xf]
  %v92 = vld [vmem:[%s0 + $0x134] sm:$0xf]
  %v93 = vld [vmem:[%s0 + $0x138] sm:$0xf]
  %v94 = vld [vmem:[%s0 + $0x13c] sm:$0xf]
  %v95 = vld [vmem:[%s0 + $0x140] sm:$0xf]
  %v96 = vld [vmem:[%s0 + $0x144] sm:$0xf]
  %v97 = vld [vmem:[%s0 + $0x148] sm:$0xf]
  %v98 = vld [vmem:[%s0 + $0x14c] sm:$0xf]
  %v99 = vld [vmem:[%s0 + $0x150] sm:$0xf]
  %v100 = vld [vmem:[%s0 + $0x154] sm:$0xf]
  %v101 = vld [vmem:[%s0 + $0x158] sm:$0xf]
  %v102 = vld [vmem:[%s0 + $0x15c] sm:$0xf]
  %v103 = vld [vmem:[%s0 + $0x160] sm:$0xf]
  %v104 = vld [vmem:[%s0 + $0x164] sm:$0xf]
  %v105 = vld [vmem:[%s0 + $0x168] sm:$0xf]
  %v106 = vld [vmem:[%s0 + $0x16c] sm:$0xf]
  %v107 = vld [vmem:[%s0 + $0x170] sm:$0xf]
  %v108 = vld [vmem:[%s0 + $0x174] sm:$0xf]
  %v109 = vld [vmem:[%s0 + $0x178] sm:$0xf]
  %v110 = vld [vmem:[%s0 + $0x17c] sm:$0xf]
  %v111 = vld [vmem:[%s0 + $0x180] sm:$0xf]
  %v112 = vld [vmem:[%s0 + $0x184] sm:$0xf]
  %v113 = vld [vmem:[%s0 + $0x188] sm:$0xf]
  %v114 = vld [vmem:[%s0 + $0x18c] sm:$0xf]
  %v115 = vld [vmem:[%s0 + $0x190] sm:$0xf]
  %v116 = vld [vmem:[%s0 + $0x194] sm:$0xf]
  %v117 = vld [vmem:[%s0 + $0x198] sm:$0xf]
  %v118 = vld [vmem:[%s0 + $0x19c] sm:$0xf]
  %v119 = vld [vmem:[%s0 + $0x1a0] sm:$0xf]
  %v120 = vld [vmem:[%s0 + $0x1a4] sm:$0xf]
  %v121 = vld [vmem:[%s0 + $0x1a8] sm:$0xf]
  %v122 = vld [vmem:[%s0 + $0x1ac] sm:$0xf]
  %v123 = vld [vmem:[%s0 + $0x1b0] sm:$0xf]
  %v124 = vld [vmem:[%s0 + $0x1b4] sm:$0xf]
  %v125 = vld [vmem:[%s0 + $0x1b8] sm:$0xf]
  %v126 = vld [vmem:[%s0 + $0x1bc] sm:$0xf]
  %v127 = vld [vmem:[%s0 + $0x1c0] sm:$0xf]
  %v128 = vld [vmem:[%s0 + $0x1c4] sm:$0xf]
  %v129 = vld [vmem:[%s0 + $0x1c8] sm:$0xf]
  %v130 = vld [vmem:[%s0 + $0x1cc] sm:$0xf]
  %v131 = vld [vmem:[%s0 + $0x1d0] sm:$0xf]
  %v132 = vld [vmem:[%s0 + $0x1d4] sm:$0xf]
  %v133 = vld [vmem:[%s0 + $0x1d8] sm:$0xf]
  %v134 = vld [vmem:[%s0 + $0x1dc] sm:$0xf]
  %v135 = vld [vmem:[%s0 + $0x1e0] sm:$0xf]
  %v136 = vld [vmem:[%s0 + $0x1e4] sm:$0xf]
  %v137 = vld [vmem:[%s0 + $0x1e8] sm:$0xf]
  %v138 = vld [vmem:[%s0 + $0x1ec] sm:$0xf]
  %v139 = vld [vmem:[%s0 + $0x1f0] sm:$0xf]
  %v140 = vld [vmem:[%s0 + $0x1f4] sm:$0xf]
  %v141 = vld [vmem:[%s0 + $0x1f8] sm:$0xf]
  %v142 = vld [vmem:[%s0 + $0x1fc] sm:$0xf]
  %v143 = vld [vmem:[%s0 + $0x200] sm:$0xf]
  %v144 = vld [vmem:[%s0 + $0x204] sm:$0xf]
  %v145 = vld [vmem:[%s0 + $0x208] sm:$0xf]
  %v146 = vld [vmem:[%s0 + $0x20c] sm:$0xf]
  %v147 = vld [vmem:[%s0 + $0x210] sm:$0xf]
  %v148 = vld [vmem:[%s0 + $0x214] sm:$0xf]
  %v149 = vld [vmem:[%s0 + $0x218] sm:$0xf]
  %v150 = vld [vmem:[%s0 + $0x21c] sm:$0xf]
  %v151 = vld [vmem:[%s0 + $0x220] sm:$0xf]
  %v152 = vld [vmem:[%s0 + $0x224] sm:$0xf]
  %v153 = vld [vmem:[%s0 + $0x228] sm:$0xf]
  %v154 = vld [vmem:[%s0 + $0x22c] sm:$0xf]
  %v155 = vld [vmem:[%s0 + $0x230] sm:$0xf]
  %v156 = vld [vmem:[%s0 + $0x234] sm:$0xf]
  %v157 = vld [vmem:[%s0 + $0x238] sm:$0xf]
  %v158 = vld [vmem:[%s0 + $0x23c] sm:$0xf]
  %v159 = vld [vmem:[%s1] sm:$0xf]
  %v160 = vld [vmem:[%s1 + $0x4] sm:$0xf]
  %v161 = vld [vmem:[%s1 + $0x8] sm:$0xf]
  %v162 = vld [vmem:[%s1 + $0xc] sm:$0xf]
  %v163 = vld [vmem:[%s1 + $0x10] sm:$0xf]
  %v164 = vld [vmem:[%s1 + $0x14] sm:$0xf]
  %v165 = vld [vmem:[%s1 + $0x18] sm:$0xf]
  %v166 = vld [vmem:[%s1 + $0x1c] sm:$0xf]
  %v167 = vld [vmem:[%s1 + $0x20] sm:$0xf]
  %v168 = vld [vmem:[%s1 + $0x24] sm:$0xf]
  %v169 = vld [vmem:[%s1 + $0x28] sm:$0xf]
  %v170 = vld [vmem:[%s1 + $0x2c] sm:$0xf]
  %v171 = vld [vmem:[%s1 + $0x30] sm:$0xf]
  %v172 = vld [vmem:[%s1 + $0x34] sm:$0xf]
  %v173 = vld [vmem:[%s1 + $0x38] sm:$0xf]
  %v174 = vld [vmem:[%s1 + $0x3c] sm:$0xf]
  %v319 = vunpack.c.l.b16 %v15
  %v320 = vunpack.c.l.b16 %v16
  %v321 = vunpack.c.l.b16 %v17
  %v322 = vunpack.c.l.b16 %v18
  %v323 = vunpack.c.l.b16 %v19
  %v324 = vunpack.c.l.b16 %v20
  %v325 = vunpack.c.l.b16 %v21
  %v326 = vunpack.c.l.b16 %v22
  %v327 = vunpack.c.l.b16 %v23
  %v328 = vunpack.c.l.b16 %v24
  %v329 = vunpack.c.l.b16 %v25
  %v330 = vunpack.c.l.b16 %v26
  %v331 = vunpack.c.l.b16 %v27
  %v332 = vunpack.c.l.b16 %v28
  %v333 = vunpack.c.l.b16 %v29
  %v334 = vunpack.c.l.b16 %v30
  %v335 = vunpack.c.l.b16 %v31
  %v336 = vunpack.c.l.b16 %v32
  %v337 = vunpack.c.l.b16 %v33
  %v338 = vunpack.c.l.b16 %v34
  %v339 = vunpack.c.l.b16 %v35
  %v340 = vunpack.c.l.b16 %v36
  %v341 = vunpack.c.l.b16 %v37
  %v342 = vunpack.c.l.b16 %v38
  %v343 = vunpack.c.l.b16 %v39
  %v344 = vunpack.c.l.b16 %v40
  %v345 = vunpack.c.l.b16 %v41
  %v346 = vunpack.c.l.b16 %v42
  %v347 = vunpack.c.l.b16 %v43
  %v348 = vunpack.c.l.b16 %v44
  %v349 = vunpack.c.l.b16 %v45
  %v350 = vunpack.c.l.b16 %v46
  %v351 = vunpack.c.l.b16 %v47
  %v352 = vunpack.c.l.b16 %v48
  %v353 = vunpack.c.l.b16 %v49
  %v354 = vunpack.c.l.b16 %v50
  %v355 = vunpack.c.l.b16 %v51
  %v356 = vunpack.c.l.b16 %v52
  %v357 = vunpack.c.l.b16 %v53
  %v358 = vunpack.c.l.b16 %v54
  %v359 = vunpack.c.l.b16 %v55
  %v360 = vunpack.c.l.b16 %v56
  %v361 = vunpack.c.l.b16 %v57
  %v362 = vunpack.c.l.b16 %v58
  %v363 = vunpack.c.l.b16 %v59
  %v364 = vunpack.c.l.b16 %v60
  %v365 = vunpack.c.l.b16 %v61
  %v366 = vunpack.c.l.b16 %v62
  %v367 = vunpack.c.l.b16 %v63
  %v368 = vunpack.c.l.b16 %v64
  %v369 = vunpack.c.l.b16 %v65
  %v370 = vunpack.c.l.b16 %v66
  %v371 = vunpack.c.l.b16 %v67
  %v372 = vunpack.c.l.b16 %v68
  %v373 = vunpack.c.l.b16 %v69
  %v374 = vunpack.c.l.b16 %v70
  %v375 = vunpack.c.l.b16 %v71
  %v376 = vunpack.c.l.b16 %v72
  %v377 = vunpack.c.l.b16 %v73
  %v378 = vunpack.c.l.b16 %v74
  %v379 = vunpack.c.l.b16 %v75
  %v380 = vunpack.c.l.b16 %v76
  %v381 = vunpack.c.l.b16 %v77
  %v382 = vunpack.c.l.b16 %v78
  %v383 = vunpack.c.l.b16 %v79
  %v384 = vunpack.c.l.b16 %v80
  %v385 = vunpack.c.l.b16 %v81
  %v386 = vunpack.c.l.b16 %v82
  %v387 = vunpack.c.l.b16 %v83
  %v388 = vunpack.c.l.b16 %v84
  %v389 = vunpack.c.l.b16 %v85
  %v390 = vunpack.c.l.b16 %v86
  %v391 = vunpack.c.l.b16 %v87
  %v392 = vunpack.c.l.b16 %v88
  %v393 = vunpack.c.l.b16 %v89
  %v394 = vunpack.c.l.b16 %v90
  %v395 = vunpack.c.l.b16 %v91
  %v396 = vunpack.c.l.b16 %v92
  %v397 = vunpack.c.l.b16 %v93
  %v398 = vunpack.c.l.b16 %v94
  %v399 = vunpack.c.l.b16 %v95
  %v400 = vunpack.c.l.b16 %v96
  %v401 = vunpack.c.l.b16 %v97
  %v402 = vunpack.c.l.b16 %v98
  %v403 = vunpack.c.l.b16 %v99
  %v404 = vunpack.c.l.b16 %v100
  %v405 = vunpack.c.l.b16 %v101
  %v406 = vunpack.c.l.b16 %v102
  %v407 = vunpack.c.l.b16 %v103
  %v408 = vunpack.c.l.b16 %v104
  %v409 = vunpack.c.l.b16 %v105
  %v410 = vunpack.c.l.b16 %v106
  %v411 = vunpack.c.l.b16 %v107
  %v412 = vunpack.c.l.b16 %v108
  %v413 = vunpack.c.l.b16 %v109
  %v414 = vunpack.c.l.b16 %v110
  %v415 = vunpack.c.l.b16 %v111
  %v416 = vunpack.c.l.b16 %v112
  %v417 = vunpack.c.l.b16 %v113
  %v418 = vunpack.c.l.b16 %v114
  %v419 = vunpack.c.l.b16 %v115
  %v420 = vunpack.c.l.b16 %v116
  %v421 = vunpack.c.l.b16 %v117
  %v422 = vunpack.c.l.b16 %v118
  %v423 = vunpack.c.l.b16 %v119
  %v424 = vunpack.c.l.b16 %v120
  %v425 = vunpack.c.l.b16 %v121
  %v426 = vunpack.c.l.b16 %v122
  %v427 = vunpack.c.l.b16 %v123
  %v428 = vunpack.c.l.b16 %v124
  %v429 = vunpack.c.l.b16 %v125
  %v430 = vunpack.c.l.b16 %v126
  %v431 = vunpack.c.l.b16 %v127
  %v432 = vunpack.c.l.b16 %v128
  %v433 = vunpack.c.l.b16 %v129
  %v434 = vunpack.c.l.b16 %v130
  %v435 = vunpack.c.l.b16 %v131
  %v436 = vunpack.c.l.b16 %v132
  %v437 = vunpack.c.l.b16 %v133
  %v438 = vunpack.c.l.b16 %v134
  %v439 = vunpack.c.l.b16 %v135
  %v440 = vunpack.c.l.b16 %v136
  %v441 = vunpack.c.l.b16 %v137
  %v442 = vunpack.c.l.b16 %v138
  %v443 = vunpack.c.l.b16 %v139
  %v444 = vunpack.c.l.b16 %v140
  %v445 = vunpack.c.l.b16 %v141
  %v446 = vunpack.c.l.b16 %v142
  %v447 = vunpack.c.l.b16 %v143
  %v448 = vunpack.c.l.b16 %v144
  %v449 = vunpack.c.l.b16 %v145
  %v450 = vunpack.c.l.b16 %v146
  %v451 = vunpack.c.l.b16 %v147
  %v452 = vunpack.c.l.b16 %v148
  %v453 = vunpack.c.l.b16 %v149
  %v454 = vunpack.c.l.b16 %v150
  %v455 = vunpack.c.l.b16 %v151
  %v456 = vunpack.c.l.b16 %v152
  %v457 = vunpack.c.l.b16 %v153
  %v458 = vunpack.c.l.b16 %v154
  %v459 = vunpack.c.l.b16 %v155
  %v460 = vunpack.c.l.b16 %v156
  %v461 = vunpack.c.l.b16 %v157
  %v462 = vunpack.c.l.b16 %v158
  %v463 = vpack.c.b16 %v320, %v319
  %v464 = vpack.c.b16 %v322, %v321
  %v465 = vpack.c.b16 %v324, %v323
  %v466 = vpack.c.b16 %v326, %v325
  %v467 = vpack.c.b16 %v328, %v327
  %v468 = vpack.c.b16 %v330, %v329
  %v469 = vpack.c.b16 %v332, %v331
  %v470 = vpack.c.b16 %v334, %v333
  %v471 = vpack.c.b16 %v336, %v335
  %v472 = vpack.c.b16 %v338, %v337
  %v473 = vpack.c.b16 %v340, %v339
  %v474 = vpack.c.b16 %v342, %v341
  %v475 = vpack.c.b16 %v344, %v343
  %v476 = vpack.c.b16 %v346, %v345
  %v477 = vpack.c.b16 %v348, %v347
  %v478 = vpack.c.b16 %v350, %v349
  %v479 = vpack.c.b16 %v352, %v351
  %v480 = vpack.c.b16 %v354, %v353
  %v481 = vpack.c.b16 %v356, %v355
  %v482 = vpack.c.b16 %v358, %v357
  %v483 = vpack.c.b16 %v360, %v359
  %v484 = vpack.c.b16 %v362, %v361
  %v485 = vpack.c.b16 %v364, %v363
  %v486 = vpack.c.b16 %v366, %v365
  %v487 = vpack.c.b16 %v368, %v367
  %v488 = vpack.c.b16 %v370, %v369
  %v489 = vpack.c.b16 %v372, %v371
  %v490 = vpack.c.b16 %v374, %v373
  %v491 = vpack.c.b16 %v376, %v375
  %v492 = vpack.c.b16 %v378, %v377
  %v493 = vpack.c.b16 %v380, %v379
  %v494 = vpack.c.b16 %v382, %v381
  %v495 = vpack.c.b16 %v384, %v383
  %v496 = vpack.c.b16 %v386, %v385
  %v497 = vpack.c.b16 %v388, %v387
  %v498 = vpack.c.b16 %v390, %v389
  %v499 = vpack.c.b16 %v392, %v391
  %v500 = vpack.c.b16 %v394, %v393
  %v501 = vpack.c.b16 %v396, %v395
  %v502 = vpack.c.b16 %v398, %v397
  %v503 = vpack.c.b16 %v400, %v399
  %v504 = vpack.c.b16 %v402, %v401
  %v505 = vpack.c.b16 %v404, %v403
  %v506 = vpack.c.b16 %v406, %v405
  %v507 = vpack.c.b16 %v408, %v407
  %v508 = vpack.c.b16 %v410, %v409
  %v509 = vpack.c.b16 %v412, %v411
  %v510 = vpack.c.b16 %v414, %v413
  %v511 = vpack.c.b16 %v416, %v415
  %v512 = vpack.c.b16 %v418, %v417
  %v513 = vpack.c.b16 %v420, %v419
  %v514 = vpack.c.b16 %v422, %v421
  %v515 = vpack.c.b16 %v424, %v423
  %v516 = vpack.c.b16 %v426, %v425
  %v517 = vpack.c.b16 %v428, %v427
  %v518 = vpack.c.b16 %v430, %v429
  %v519 = vpack.c.b16 %v432, %v431
  %v520 = vpack.c.b16 %v434, %v433
  %v521 = vpack.c.b16 %v436, %v435
  %v522 = vpack.c.b16 %v438, %v437
  %v523 = vpack.c.b16 %v440, %v439
  %v524 = vpack.c.b16 %v442, %v441
  %v525 = vpack.c.b16 %v444, %v443
  %v526 = vpack.c.b16 %v446, %v445
  %v527 = vpack.c.b16 %v448, %v447
  %v528 = vpack.c.b16 %v450, %v449
  %v529 = vpack.c.b16 %v452, %v451
  %v530 = vpack.c.b16 %v454, %v453
  %v531 = vpack.c.b16 %v456, %v455
  %v532 = vpack.c.b16 %v458, %v457
  %v533 = vpack.c.b16 %v460, %v459
  %v534 = vpack.c.b16 %v462, %v461
  %v623 = vunpack.c.l.b16 %v159
  %v624 = vunpack.c.l.b16 %v160
  %v625 = vunpack.c.l.b16 %v161
  %v626 = vunpack.c.l.b16 %v162
  %v627 = vunpack.c.l.b16 %v163
  %v628 = vunpack.c.l.b16 %v164
  %v629 = vunpack.c.l.b16 %v165
  %v630 = vunpack.c.l.b16 %v166
  %v631 = vunpack.c.l.b16 %v167
  %v632 = vunpack.c.l.b16 %v168
  %v633 = vunpack.c.l.b16 %v169
  %v634 = vunpack.c.l.b16 %v170
  %v635 = vunpack.c.l.b16 %v171
  %v636 = vunpack.c.l.b16 %v172
  %v637 = vunpack.c.l.b16 %v173
  %v638 = vunpack.c.l.b16 %v174
  %v639 = vpack.c.b16 %v624, %v623
  %v640 = vpack.c.b16 %v626, %v625
  %v641 = vpack.c.b16 %v628, %v627
  %v642 = vpack.c.b16 %v630, %v629
  %v643 = vpack.c.b16 %v632, %v631
  %v644 = vpack.c.b16 %v634, %v633
  %v645 = vpack.c.b16 %v636, %v635
  %v646 = vpack.c.b16 %v638, %v637
  %655 = vmatprep.subr.bf16.mxu0 0
  %656 = vmatpush1.bf16.msra.mxu0 %v639
  %657 = vmatprep.subr.bf16.mxu0 0
  %658 = vmatpush1.bf16.msra.mxu0 %v640
  %659 = vmatprep.subr.bf16.mxu0 0
  %660 = vmatpush1.bf16.msra.mxu0 %v641
  %661 = vmatprep.subr.bf16.mxu0 0
  %662 = vmatpush1.bf16.msra.mxu0 %v642
  %663 = vmatprep.subr.bf16.mxu0 0
  %664 = vmatpush1.bf16.msra.mxu0 %v643
  %665 = vmatprep.subr.bf16.mxu0 0
  %666 = vmatpush1.bf16.msra.mxu0 %v644
  %667 = vmatprep.subr.bf16.mxu0 0
  %668 = vmatpush1.bf16.msra.mxu0 %v645
  %669 = vmatprep.subr.bf16.mxu0 0
  %670 = vmatpush1.bf16.msra.mxu0 %v646
  %671 = vmatprep.subr.bf16.mxu0 0
  %672 = vmatpush1.bf16.msra.mxu0 0
  %673 = vmatprep.subr.bf16.mxu0 0
  %674 = vmatpush1.bf16.msra.mxu0 0
  %675 = vmatprep.subr.bf16.mxu0 0
  %676 = vmatpush1.bf16.msra.mxu0 0
  %677 = vmatprep.subr.bf16.mxu0 0
  %678 = vmatpush1.bf16.msra.mxu0 0
  %679 = vmatprep.subr.bf16.mxu0 0
  %680 = vmatpush1.bf16.msra.mxu0 0
  %681 = vmatprep.subr.bf16.mxu0 0
  %682 = vmatpush1.bf16.msra.mxu0 0
  %683 = vmatprep.subr.bf16.mxu0 0
  %684 = vmatpush1.bf16.msra.mxu0 0
  %685 = vmatprep.subr.bf16.mxu0 0
  %686 = vmatpush1.bf16.msra.mxu0 0
  %687 = vmatprep.mubr.bf16.mxu0 0
  %688 = vmatmul.mubr.bf16.gmra.mrb[0].mxu0 %v463
  %v689 = vpop.f32.mrb[0].mxu0
  %v690 = vadd.f32 0.0, %v689
  %v691 = vpop.f32.mrb[0].mxu0
  %v692 = vpop.f32.mrb[0].mxu0
  %v693 = vadd.f32 0.0, %v692
  %v694 = vpop.f32.mrb[0].mxu0
  %695 = vmatprep.mubr.bf16.mxu0 0
  %696 = vmatmul.mubr.bf16.gmra.mrb[0].mxu0 %v464
  %v697 = vpop.f32.mrb[0].mxu0
  %v698 = vadd.f32 0.0, %v697
  %v699 = vpop.f32.mrb[0].mxu0
  %v700 = vpop.f32.mrb[0].mxu0
  %v701 = vadd.f32 0.0, %v700
  %v702 = vpop.f32.mrb[0].mxu0
  %703 = vmatprep.mubr.bf16.mxu0 0
  %704 = vmatmul.mubr.bf16.gmra.mrb[0].mxu0 %v465
  %v705 = vpop.f32.mrb[0].mxu0
  %v706 = vadd.f32 0.0, %v705
  %v707 = vpop.f32.mrb[0].mxu0
  %v708 = vpop.f32.mrb[0].mxu0
  %v709 = vadd.f32 0.0, %v708
  %v710 = vpop.f32.mrb[0].mxu0
  %711 = vmatprep.mubr.bf16.mxu0 0
  %712 = vmatmul.mubr.bf16.gmra.mrb[0].mxu0 %v466
  %v713 = vpop.f32.mrb[0].mxu0
  %v714 = vadd.f32 0.0, %v713
  %v715 = vpop.f32.mrb[0].mxu0
  %v716 = vpop.f32.mrb[0].mxu0
  %v717 = vadd.f32 0.0, %v716
  %v718 = vpop.f32.mrb[0].mxu0
  %719 = vmatprep.mubr.bf16.mxu0 0
  %720 = vmatmul.mubr.bf16.gmra.mrb[0].mxu0 %v467
  %v721 = vpop.f32.mrb[0].mxu0
  %v722 = vadd.f32 0.0, %v721
  %v723 = vpop.f32.mrb[0].mxu0
  %v724 = vpop.f32.mrb[0].mxu0
  %v725 = vadd.f32 0.0, %v724
  %v726 = vpop.f32.mrb[0].mxu0
  %727 = vmatprep.mubr.bf16.mxu0 0
  %728 = vmatmul.mubr.bf16.gmra.mrb[0].mxu0 %v468
  %v729 = vpop.f32.mrb[0].mxu0
  %v730 = vadd.f32 0.0, %v729
  %v731 = vpop.f32.mrb[0].mxu0
  %v732 = vpop.f32.mrb[0].mxu0
  %v733 = vadd.f32 0.0, %v732
  %v734 = vpop.f32.mrb[0].mxu0
  %735 = vmatprep.mubr.bf16.mxu0 0
  %736 = vmatmul.mubr.bf16.gmra.mrb[0].mxu0 %v469
  %v737 = vpop.f32.mrb[0].mxu0
  %v738 = vadd.f32 0.0, %v737
  %v739 = vpop.f32.mrb[0].mxu0
  %v740 = vpop.f32.mrb[0].mxu0
  %v741 = vadd.f32 0.0, %v740
  %v742 = vpop.f32.mrb[0].mxu0
  %743 = vmatprep.mubr.bf16.mxu0 0
  %744 = vmatmul.mubr.bf16.gmra.mrb[0].mxu0 %v470
  %v745 = vpop.f32.mrb[0].mxu0
  %v746 = vadd.f32 0.0, %v745
  %v747 = vpop.f32.mrb[0].mxu0
  %v748 = vpop.f32.mrb[0].mxu0
  %v749 = vadd.f32 0.0, %v748
  %v750 = vpop.f32.mrb[0].mxu0
  %751 = vmatprep.mubr.bf16.mxu0 0
  %752 = vmatmul.mubr.bf16.gmra.mrb[0].mxu0 %v471
  %v753 = vpop.f32.mrb[0].mxu0
  %v754 = vadd.f32 0.0, %v753
  %v755 = vpop.f32.mrb[0].mxu0
  %v756 = vpop.f32.mrb[0].mxu0
  %v757 = vadd.f32 0.0, %v756
  %v758 = vpop.f32.mrb[0].mxu0
  %759 = vmatprep.mubr.bf16.mxu0 0
  %760 = vmatmul.mubr.bf16.gmra.mrb[0].mxu0 %v472
  %v761 = vpop.f32.mrb[0].mxu0
  %v762 = vadd.f32 0.0, %v761
  %v763 = vpop.f32.mrb[0].mxu0
  %v764 = vpop.f32.mrb[0].mxu0
  %v765 = vadd.f32 0.0, %v764
  %v766 = vpop.f32.mrb[0].mxu0
  %767 = vmatprep.mubr.bf16.mxu0 0
  %768 = vmatmul.mubr.bf16.gmra.mrb[0].mxu0 %v473
  %v769 = vpop.f32.mrb[0].mxu0
  %v770 = vadd.f32 0.0, %v769
  %v771 = vpop.f32.mrb[0].mxu0
  %v772 = vpop.f32.mrb[0].mxu0
  %v773 = vadd.f32 0.0, %v772
  %v774 = vpop.f32.mrb[0].mxu0
  %775 = vmatprep.mubr.bf16.mxu0 0
  %776 = vmatmul.mubr.bf16.gmra.mrb[0].mxu0 %v474
  %v777 = vpop.f32.mrb[0].mxu0
  %v778 = vadd.f32 0.0, %v777
  %v779 = vpop.f32.mrb[0].mxu0
  %v780 = vpop.f32.mrb[0].mxu0
  %v781 = vadd.f32 0.0, %v780
  %v782 = vpop.f32.mrb[0].mxu0
  %783 = vmatprep.mubr.bf16.mxu0 0
  %784 = vmatmul.mubr.bf16.gmra.mrb[0].mxu0 %v475
  %v785 = vpop.f32.mrb[0].mxu0
  %v786 = vadd.f32 0.0, %v785
  %v787 = vpop.f32.mrb[0].mxu0
  %v788 = vpop.f32.mrb[0].mxu0
  %v789 = vadd.f32 0.0, %v788
  %v790 = vpop.f32.mrb[0].mxu0
  %791 = vmatprep.mubr.bf16.mxu0 0
  %792 = vmatmul.mubr.bf16.gmra.mrb[0].mxu0 %v476
  %v793 = vpop.f32.mrb[0].mxu0
  %v794 = vadd.f32 0.0, %v793
  %v795 = vpop.f32.mrb[0].mxu0
  %v796 = vpop.f32.mrb[0].mxu0
  %v797 = vadd.f32 0.0, %v796
  %v798 = vpop.f32.mrb[0].mxu0
  %799 = vmatprep.mubr.bf16.mxu0 0
  %800 = vmatmul.mubr.bf16.gmra.mrb[0].mxu0 %v477
  %v801 = vpop.f32.mrb[0].mxu0
  %v802 = vadd.f32 0.0, %v801
  %v803 = vpop.f32.mrb[0].mxu0
  %v804 = vpop.f32.mrb[0].mxu0
  %v805 = vadd.f32 0.0, %v804
  %v806 = vpop.f32.mrb[0].mxu0
  %807 = vmatprep.mubr.bf16.mxu0 0
  %808 = vmatmul.mubr.bf16.gmra.mrb[0].mxu0 %v478
  %v809 = vpop.f32.mrb[0].mxu0
  %v810 = vadd.f32 0.0, %v809
  %v811 = vpop.f32.mrb[0].mxu0
  %v812 = vpop.f32.mrb[0].mxu0
  %v813 = vadd.f32 0.0, %v812
  %v814 = vpop.f32.mrb[0].mxu0
  %815 = vmatprep.mubr.bf16.mxu0 0
  %816 = vmatmul.mubr.bf16.gmra.mrb[0].mxu0 %v479
  %v817 = vpop.f32.mrb[0].mxu0
  %v818 = vadd.f32 0.0, %v817
  %v819 = vpop.f32.mrb[0].mxu0
  %v820 = vpop.f32.mrb[0].mxu0
  %v821 = vadd.f32 0.0, %v820
  %v822 = vpop.f32.mrb[0].mxu0
  %823 = vmatprep.mubr.bf16.mxu0 0
  %824 = vmatmul.mubr.bf16.gmra.mrb[0].mxu0 %v480
  %v825 = vpop.f32.mrb[0].mxu0
  %v826 = vadd.f32 0.0, %v825
  %v827 = vpop.f32.mrb[0].mxu0
  %v828 = vpop.f32.mrb[0].mxu0
  %v829 = vadd.f32 0.0, %v828
  %v830 = vpop.f32.mrb[0].mxu0
  %831 = vmatprep.mubr.bf16.mxu0 0
  %832 = vmatmul.mubr.bf16.gmra.mrb[0].mxu0 %v481
  %v833 = vpop.f32.mrb[0].mxu0
  %v834 = vadd.f32 0.0, %v833
  %v835 = vpop.f32.mrb[0].mxu0
  %v836 = vpop.f32.mrb[0].mxu0
  %v837 = vadd.f32 0.0, %v836
  %v838 = vpop.f32.mrb[0].mxu0
  %839 = vmatprep.mubr.bf16.mxu0 0
  %840 = vmatmul.mubr.bf16.gmra.mrb[0].mxu0 %v482
  %v841 = vpop.f32.mrb[0].mxu0
  %v842 = vadd.f32 0.0, %v841
  %v843 = vpop.f32.mrb[0].mxu0
  %v844 = vpop.f32.mrb[0].mxu0
  %v845 = vadd.f32 0.0, %v844
  %v846 = vpop.f32.mrb[0].mxu0
  %847 = vmatprep.mubr.bf16.mxu0 0
  %848 = vmatmul.mubr.bf16.gmra.mrb[0].mxu0 %v483
  %v849 = vpop.f32.mrb[0].mxu0
  %v850 = vadd.f32 0.0, %v849
  %v851 = vpop.f32.mrb[0].mxu0
  %v852 = vpop.f32.mrb[0].mxu0
  %v853 = vadd.f32 0.0, %v852
  %v854 = vpop.f32.mrb[0].mxu0
  %855 = vmatprep.mubr.bf16.mxu0 0
  %856 = vmatmul.mubr.bf16.gmra.mrb[0].mxu0 %v484
  %v857 = vpop.f32.mrb[0].mxu0
  %v858 = vadd.f32 0.0, %v857
  %v859 = vpop.f32.mrb[0].mxu0
  %v860 = vpop.f32.mrb[0].mxu0
  %v861 = vadd.f32 0.0, %v860
  %v862 = vpop.f32.mrb[0].mxu0
  %863 = vmatprep.mubr.bf16.mxu0 0
  %864 = vmatmul.mubr.bf16.gmra.mrb[0].mxu0 %v485
  %v865 = vpop.f32.mrb[0].mxu0
  %v866 = vadd.f32 0.0, %v865
  %v867 = vpop.f32.mrb[0].mxu0
  %v868 = vpop.f32.mrb[0].mxu0
  %v869 = vadd.f32 0.0, %v868
  %v870 = vpop.f32.mrb[0].mxu0
  %871 = vmatprep.mubr.bf16.mxu0 0
  %872 = vmatmul.mubr.bf16.gmra.mrb[0].mxu0 %v486
  %v873 = vpop.f32.mrb[0].mxu0
  %v874 = vadd.f32 0.0, %v873
  %v875 = vpop.f32.mrb[0].mxu0
  %v876 = vpop.f32.mrb[0].mxu0
  %v877 = vadd.f32 0.0, %v876
  %v878 = vpop.f32.mrb[0].mxu0
  %879 = vmatprep.mubr.bf16.mxu0 0
  %880 = vmatmul.mubr.bf16.gmra.mrb[0].mxu0 %v487
  %v881 = vpop.f32.mrb[0].mxu0
  %v882 = vadd.f32 0.0, %v881
  %v883 = vpop.f32.mrb[0].mxu0
  %v884 = vpop.f32.mrb[0].mxu0
  %v885 = vadd.f32 0.0, %v884
  %v886 = vpop.f32.mrb[0].mxu0
  %887 = vmatprep.mubr.bf16.mxu0 0
  %888 = vmatmul.mubr.bf16.gmra.mrb[0].mxu0 %v488
  %v889 = vpop.f32.mrb[0].mxu0
  %v890 = vadd.f32 0.0, %v889
  %v891 = vpop.f32.mrb[0].mxu0
  %v892 = vpop.f32.mrb[0].mxu0
  %v893 = vadd.f32 0.0, %v892
  %v894 = vpop.f32.mrb[0].mxu0
  %895 = vmatprep.mubr.bf16.mxu0 0
  %896 = vmatmul.mubr.bf16.gmra.mrb[0].mxu0 %v489
  %v897 = vpop.f32.mrb[0].mxu0
  %v898 = vadd.f32 0.0, %v897
  %v899 = vpop.f32.mrb[0].mxu0
  %v900 = vpop.f32.mrb[0].mxu0
  %v901 = vadd.f32 0.0, %v900
  %v902 = vpop.f32.mrb[0].mxu0
  %903 = vmatprep.mubr.bf16.mxu0 0
  %904 = vmatmul.mubr.bf16.gmra.mrb[0].mxu0 %v490
  %v905 = vpop.f32.mrb[0].mxu0
  %v906 = vadd.f32 0.0, %v905
  %v907 = vpop.f32.mrb[0].mxu0
  %v908 = vpop.f32.mrb[0].mxu0
  %v909 = vadd.f32 0.0, %v908
  %v910 = vpop.f32.mrb[0].mxu0
  %911 = vmatprep.mubr.bf16.mxu0 0
  %912 = vmatmul.mubr.bf16.gmra.mrb[0].mxu0 %v491
  %v913 = vpop.f32.mrb[0].mxu0
  %v914 = vadd.f32 0.0, %v913
  %v915 = vpop.f32.mrb[0].mxu0
  %v916 = vpop.f32.mrb[0].mxu0
  %v917 = vadd.f32 0.0, %v916
  %v918 = vpop.f32.mrb[0].mxu0
  %919 = vmatprep.mubr.bf16.mxu0 0
  %920 = vmatmul.mubr.bf16.gmra.mrb[0].mxu0 %v492
  %v921 = vpop.f32.mrb[0].mxu0
  %v922 = vadd.f32 0.0, %v921
  %v923 = vpop.f32.mrb[0].mxu0
  %v924 = vpop.f32.mrb[0].mxu0
  %v925 = vadd.f32 0.0, %v924
  %v926 = vpop.f32.mrb[0].mxu0
  %927 = vmatprep.mubr.bf16.mxu0 0
  %928 = vmatmul.mubr.bf16.gmra.mrb[0].mxu0 %v493
  %v929 = vpop.f32.mrb[0].mxu0
  %v930 = vadd.f32 0.0, %v929
  %v931 = vpop.f32.mrb[0].mxu0
  %v932 = vpop.f32.mrb[0].mxu0
  %v933 = vadd.f32 0.0, %v932
  %v934 = vpop.f32.mrb[0].mxu0
  %935 = vmatprep.mubr.bf16.mxu0 0
  %936 = vmatmul.mubr.bf16.gmra.mrb[0].mxu0 %v494
  %v937 = vpop.f32.mrb[0].mxu0
  %v938 = vadd.f32 0.0, %v937
  %v939 = vpop.f32.mrb[0].mxu0
  %v940 = vpop.f32.mrb[0].mxu0
  %v941 = vadd.f32 0.0, %v940
  %v942 = vpop.f32.mrb[0].mxu0
  %943 = vmatprep.mubr.bf16.mxu0 0
  %944 = vmatmul.mubr.bf16.gmra.mrb[0].mxu0 %v495
  %v945 = vpop.f32.mrb[0].mxu0
  %v946 = vadd.f32 0.0, %v945
  %v947 = vpop.f32.mrb[0].mxu0
  %v948 = vpop.f32.mrb[0].mxu0
  %v949 = vadd.f32 0.0, %v948
  %v950 = vpop.f32.mrb[0].mxu0
  %951 = vmatprep.mubr.bf16.mxu0 0
  %952 = vmatmul.mubr.bf16.gmra.mrb[0].mxu0 %v496
  %v953 = vpop.f32.mrb[0].mxu0
  %v954 = vadd.f32 0.0, %v953
  %v955 = vpop.f32.mrb[0].mxu0
  %v956 = vpop.f32.mrb[0].mxu0
  %v957 = vadd.f32 0.0, %v956
  %v958 = vpop.f32.mrb[0].mxu0
  %959 = vmatprep.mubr.bf16.mxu0 0
  %960 = vmatmul.mubr.bf16.gmra.mrb[0].mxu0 %v497
  %v961 = vpop.f32.mrb[0].mxu0
  %v962 = vadd.f32 0.0, %v961
  %v963 = vpop.f32.mrb[0].mxu0
  %v964 = vpop.f32.mrb[0].mxu0
  %v965 = vadd.f32 0.0, %v964
  %v966 = vpop.f32.mrb[0].mxu0
  %967 = vmatprep.mubr.bf16.mxu0 0
  %968 = vmatmul.mubr.bf16.gmra.mrb[0].mxu0 %v498
  %v969 = vpop.f32.mrb[0].mxu0
  %v970 = vadd.f32 0.0, %v969
  %v971 = vpop.f32.mrb[0].mxu0
  %v972 = vpop.f32.mrb[0].mxu0
  %v973 = vadd.f32 0.0, %v972
  %v974 = vpop.f32.mrb[0].mxu0
  %975 = vmatprep.mubr.bf16.mxu0 0
  %976 = vmatmul.mubr.bf16.gmra.mrb[0].mxu0 %v499
  %v977 = vpop.f32.mrb[0].mxu0
  %v978 = vadd.f32 0.0, %v977
  %v979 = vpop.f32.mrb[0].mxu0
  %v980 = vpop.f32.mrb[0].mxu0
  %v981 = vadd.f32 0.0, %v980
  %v982 = vpop.f32.mrb[0].mxu0
  %983 = vmatprep.mubr.bf16.mxu0 0
  %984 = vmatmul.mubr.bf16.gmra.mrb[0].mxu0 %v500
  %v985 = vpop.f32.mrb[0].mxu0
  %v986 = vadd.f32 0.0, %v985
  %v987 = vpop.f32.mrb[0].mxu0
  %v988 = vpop.f32.mrb[0].mxu0
  %v989 = vadd.f32 0.0, %v988
  %v990 = vpop.f32.mrb[0].mxu0
  %991 = vmatprep.mubr.bf16.mxu0 0
  %992 = vmatmul.mubr.bf16.gmra.mrb[0].mxu0 %v501
  %v993 = vpop.f32.mrb[0].mxu0
  %v994 = vadd.f32 0.0, %v993
  %v995 = vpop.f32.mrb[0].mxu0
  %v996 = vpop.f32.mrb[0].mxu0
  %v997 = vadd.f32 0.0, %v996
  %v998 = vpop.f32.mrb[0].mxu0
  %999 = vmatprep.mubr.bf16.mxu0 0
  %1000 = vmatmul.mubr.bf16.gmra.mrb[0].mxu0 %v502
  %v1001 = vpop.f32.mrb[0].mxu0
  %v1002 = vadd.f32 0.0, %v1001
  %v1003 = vpop.f32.mrb[0].mxu0
  %v1004 = vpop.f32.mrb[0].mxu0
  %v1005 = vadd.f32 0.0, %v1004
  %v1006 = vpop.f32.mrb[0].mxu0
  %1007 = vmatprep.mubr.bf16.mxu0 0
  %1008 = vmatmul.mubr.bf16.gmra.mrb[0].mxu0 %v503
  %v1009 = vpop.f32.mrb[0].mxu0
  %v1010 = vadd.f32 0.0, %v1009
  %v1011 = vpop.f32.mrb[0].mxu0
  %v1012 = vpop.f32.mrb[0].mxu0
  %v1013 = vadd.f32 0.0, %v1012
  %v1014 = vpop.f32.mrb[0].mxu0
  %1015 = vmatprep.mubr.bf16.mxu0 0
  %1016 = vmatmul.mubr.bf16.gmra.mrb[0].mxu0 %v504
  %v1017 = vpop.f32.mrb[0].mxu0
  %v1018 = vadd.f32 0.0, %v1017
  %v1019 = vpop.f32.mrb[0].mxu0
  %v1020 = vpop.f32.mrb[0].mxu0
  %v1021 = vadd.f32 0.0, %v1020
  %v1022 = vpop.f32.mrb[0].mxu0
  %1023 = vmatprep.mubr.bf16.mxu0 0
  %1024 = vmatmul.mubr.bf16.gmra.mrb[0].mxu0 %v505
  %v1025 = vpop.f32.mrb[0].mxu0
  %v1026 = vadd.f32 0.0, %v1025
  %v1027 = vpop.f32.mrb[0].mxu0
  %v1028 = vpop.f32.mrb[0].mxu0
  %v1029 = vadd.f32 0.0, %v1028
  %v1030 = vpop.f32.mrb[0].mxu0
  %1031 = vmatprep.mubr.bf16.mxu0 0
  %1032 = vmatmul.mubr.bf16.gmra.mrb[0].mxu0 %v506
  %v1033 = vpop.f32.mrb[0].mxu0
  %v1034 = vadd.f32 0.0, %v1033
  %v1035 = vpop.f32.mrb[0].mxu0
  %v1036 = vpop.f32.mrb[0].mxu0
  %v1037 = vadd.f32 0.0, %v1036
  %v1038 = vpop.f32.mrb[0].mxu0
  %1039 = vmatprep.mubr.bf16.mxu0 0
  %1040 = vmatmul.mubr.bf16.gmra.mrb[0].mxu0 %v507
  %v1041 = vpop.f32.mrb[0].mxu0
  %v1042 = vadd.f32 0.0, %v1041
  %v1043 = vpop.f32.mrb[0].mxu0
  %v1044 = vpop.f32.mrb[0].mxu0
  %v1045 = vadd.f32 0.0, %v1044
  %v1046 = vpop.f32.mrb[0].mxu0
  %1047 = vmatprep.mubr.bf16.mxu0 0
  %1048 = vmatmul.mubr.bf16.gmra.mrb[0].mxu0 %v508
  %v1049 = vpop.f32.mrb[0].mxu0
  %v1050 = vadd.f32 0.0, %v1049
  %v1051 = vpop.f32.mrb[0].mxu0
  %v1052 = vpop.f32.mrb[0].mxu0
  %v1053 = vadd.f32 0.0, %v1052
  %v1054 = vpop.f32.mrb[0].mxu0
  %1055 = vmatprep.mubr.bf16.mxu0 0
  %1056 = vmatmul.mubr.bf16.gmra.mrb[0].mxu0 %v509
  %v1057 = vpop.f32.mrb[0].mxu0
  %v1058 = vadd.f32 0.0, %v1057
  %v1059 = vpop.f32.mrb[0].mxu0
  %v1060 = vpop.f32.mrb[0].mxu0
  %v1061 = vadd.f32 0.0, %v1060
  %v1062 = vpop.f32.mrb[0].mxu0
  %1063 = vmatprep.mubr.bf16.mxu0 0
  %1064 = vmatmul.mubr.bf16.gmra.mrb[0].mxu0 %v510
  %v1065 = vpop.f32.mrb[0].mxu0
  %v1066 = vadd.f32 0.0, %v1065
  %v1067 = vpop.f32.mrb[0].mxu0
  %v1068 = vpop.f32.mrb[0].mxu0
  %v1069 = vadd.f32 0.0, %v1068
  %v1070 = vpop.f32.mrb[0].mxu0
  %1071 = vmatprep.mubr.bf16.mxu0 0
  %1072 = vmatmul.mubr.bf16.gmra.mrb[0].mxu0 %v511
  %v1073 = vpop.f32.mrb[0].mxu0
  %v1074 = vadd.f32 0.0, %v1073
  %v1075 = vpop.f32.mrb[0].mxu0
  %v1076 = vpop.f32.mrb[0].mxu0
  %v1077 = vadd.f32 0.0, %v1076
  %v1078 = vpop.f32.mrb[0].mxu0
  %1079 = vmatprep.mubr.bf16.mxu0 0
  %1080 = vmatmul.mubr.bf16.gmra.mrb[0].mxu0 %v512
  %v1081 = vpop.f32.mrb[0].mxu0
  %v1082 = vadd.f32 0.0, %v1081
  %v1083 = vpop.f32.mrb[0].mxu0
  %v1084 = vpop.f32.mrb[0].mxu0
  %v1085 = vadd.f32 0.0, %v1084
  %v1086 = vpop.f32.mrb[0].mxu0
  %1087 = vmatprep.mubr.bf16.mxu0 0
  %1088 = vmatmul.mubr.bf16.gmra.mrb[0].mxu0 %v513
  %v1089 = vpop.f32.mrb[0].mxu0
  %v1090 = vadd.f32 0.0, %v1089
  %v1091 = vpop.f32.mrb[0].mxu0
  %v1092 = vpop.f32.mrb[0].mxu0
  %v1093 = vadd.f32 0.0, %v1092
  %v1094 = vpop.f32.mrb[0].mxu0
  %1095 = vmatprep.mubr.bf16.mxu0 0
  %1096 = vmatmul.mubr.bf16.gmra.mrb[0].mxu0 %v514
  %v1097 = vpop.f32.mrb[0].mxu0
  %v1098 = vadd.f32 0.0, %v1097
  %v1099 = vpop.f32.mrb[0].mxu0
  %v1100 = vpop.f32.mrb[0].mxu0
  %v1101 = vadd.f32 0.0, %v1100
  %v1102 = vpop.f32.mrb[0].mxu0
  %1103 = vmatprep.mubr.bf16.mxu0 0
  %1104 = vmatmul.mubr.bf16.gmra.mrb[0].mxu0 %v515
  %v1105 = vpop.f32.mrb[0].mxu0
  %v1106 = vadd.f32 0.0, %v1105
  %v1107 = vpop.f32.mrb[0].mxu0
  %v1108 = vpop.f32.mrb[0].mxu0
  %v1109 = vadd.f32 0.0, %v1108
  %v1110 = vpop.f32.mrb[0].mxu0
  %1111 = vmatprep.mubr.bf16.mxu0 0
  %1112 = vmatmul.mubr.bf16.gmra.mrb[0].mxu0 %v516
  %v1113 = vpop.f32.mrb[0].mxu0
  %v1114 = vadd.f32 0.0, %v1113
  %v1115 = vpop.f32.mrb[0].mxu0
  %v1116 = vpop.f32.mrb[0].mxu0
  %v1117 = vadd.f32 0.0, %v1116
  %v1118 = vpop.f32.mrb[0].mxu0
  %1119 = vmatprep.mubr.bf16.mxu0 0
  %1120 = vmatmul.mubr.bf16.gmra.mrb[0].mxu0 %v517
  %v1121 = vpop.f32.mrb[0].mxu0
  %v1122 = vadd.f32 0.0, %v1121
  %v1123 = vpop.f32.mrb[0].mxu0
  %v1124 = vpop.f32.mrb[0].mxu0
  %v1125 = vadd.f32 0.0, %v1124
  %v1126 = vpop.f32.mrb[0].mxu0
  %1127 = vmatprep.mubr.bf16.mxu0 0
  %1128 = vmatmul.mubr.bf16.gmra.mrb[0].mxu0 %v518
  %v1129 = vpop.f32.mrb[0].mxu0
  %v1130 = vadd.f32 0.0, %v1129
  %v1131 = vpop.f32.mrb[0].mxu0
  %v1132 = vpop.f32.mrb[0].mxu0
  %v1133 = vadd.f32 0.0, %v1132
  %v1134 = vpop.f32.mrb[0].mxu0
  %1135 = vmatprep.mubr.bf16.mxu0 0
  %1136 = vmatmul.mubr.bf16.gmra.mrb[0].mxu0 %v519
  %v1137 = vpop.f32.mrb[0].mxu0
  %v1138 = vadd.f32 0.0, %v1137
  %v1139 = vpop.f32.mrb[0].mxu0
  %v1140 = vpop.f32.mrb[0].mxu0
  %v1141 = vadd.f32 0.0, %v1140
  %v1142 = vpop.f32.mrb[0].mxu0
  %1143 = vmatprep.mubr.bf16.mxu0 0
  %1144 = vmatmul.mubr.bf16.gmra.mrb[0].mxu0 %v520
  %v1145 = vpop.f32.mrb[0].mxu0
  %v1146 = vadd.f32 0.0, %v1145
  %v1147 = vpop.f32.mrb[0].mxu0
  %v1148 = vpop.f32.mrb[0].mxu0
  %v1149 = vadd.f32 0.0, %v1148
  %v1150 = vpop.f32.mrb[0].mxu0
  %1151 = vmatprep.mubr.bf16.mxu0 0
  %1152 = vmatmul.mubr.bf16.gmra.mrb[0].mxu0 %v521
  %v1153 = vpop.f32.mrb[0].mxu0
  %v1154 = vadd.f32 0.0, %v1153
  %v1155 = vpop.f32.mrb[0].mxu0
  %v1156 = vpop.f32.mrb[0].mxu0
  %v1157 = vadd.f32 0.0, %v1156
  %v1158 = vpop.f32.mrb[0].mxu0
  %1159 = vmatprep.mubr.bf16.mxu0 0
  %1160 = vmatmul.mubr.bf16.gmra.mrb[0].mxu0 %v522
  %v1161 = vpop.f32.mrb[0].mxu0
  %v1162 = vadd.f32 0.0, %v1161
  %v1163 = vpop.f32.mrb[0].mxu0
  %v1164 = vpop.f32.mrb[0].mxu0
  %v1165 = vadd.f32 0.0, %v1164
  %v1166 = vpop.f32.mrb[0].mxu0
  %1167 = vmatprep.mubr.bf16.mxu0 0
  %1168 = vmatmul.mubr.bf16.gmra.mrb[0].mxu0 %v523
  %v1169 = vpop.f32.mrb[0].mxu0
  %v1170 = vadd.f32 0.0, %v1169
  %v1171 = vpop.f32.mrb[0].mxu0
  %v1172 = vpop.f32.mrb[0].mxu0
  %v1173 = vadd.f32 0.0, %v1172
  %v1174 = vpop.f32.mrb[0].mxu0
  %1175 = vmatprep.mubr.bf16.mxu0 0
  %1176 = vmatmul.mubr.bf16.gmra.mrb[0].mxu0 %v524
  %v1177 = vpop.f32.mrb[0].mxu0
  %v1178 = vadd.f32 0.0, %v1177
  %v1179 = vpop.f32.mrb[0].mxu0
  %v1180 = vpop.f32.mrb[0].mxu0
  %v1181 = vadd.f32 0.0, %v1180
  %v1182 = vpop.f32.mrb[0].mxu0
  %1183 = vmatprep.mubr.bf16.mxu0 0
  %1184 = vmatmul.mubr.bf16.gmra.mrb[0].mxu0 %v525
  %v1185 = vpop.f32.mrb[0].mxu0
  %v1186 = vadd.f32 0.0, %v1185
  %v1187 = vpop.f32.mrb[0].mxu0
  %v1188 = vpop.f32.mrb[0].mxu0
  %v1189 = vadd.f32 0.0, %v1188
  %v1190 = vpop.f32.mrb[0].mxu0
  %1191 = vmatprep.mubr.bf16.mxu0 0
  %1192 = vmatmul.mubr.bf16.gmra.mrb[0].mxu0 %v526
  %v1193 = vpop.f32.mrb[0].mxu0
  %v1194 = vadd.f32 0.0, %v1193
  %v1195 = vpop.f32.mrb[0].mxu0
  %v1196 = vpop.f32.mrb[0].mxu0
  %v1197 = vadd.f32 0.0, %v1196
  %v1198 = vpop.f32.mrb[0].mxu0
  %1199 = vmatprep.mubr.bf16.mxu0 0
  %1200 = vmatmul.mubr.bf16.gmra.mrb[0].mxu0 %v527
  %v1201 = vpop.f32.mrb[0].mxu0
  %v1202 = vadd.f32 0.0, %v1201
  %v1203 = vpop.f32.mrb[0].mxu0
  %v1204 = vpop.f32.mrb[0].mxu0
  %v1205 = vadd.f32 0.0, %v1204
  %v1206 = vpop.f32.mrb[0].mxu0
  %1207 = vmatprep.mubr.bf16.mxu0 0
  %1208 = vmatmul.mubr.bf16.gmra.mrb[0].mxu0 %v528
  %v1209 = vpop.f32.mrb[0].mxu0
  %v1210 = vadd.f32 0.0, %v1209
  %v1211 = vpop.f32.mrb[0].mxu0
  %v1212 = vpop.f32.mrb[0].mxu0
  %v1213 = vadd.f32 0.0, %v1212
  %v1214 = vpop.f32.mrb[0].mxu0
  %1215 = vmatprep.mubr.bf16.mxu0 0
  %1216 = vmatmul.mubr.bf16.gmra.mrb[0].mxu0 %v529
  %v1217 = vpop.f32.mrb[0].mxu0
  %v1218 = vadd.f32 0.0, %v1217
  %v1219 = vpop.f32.mrb[0].mxu0
  %v1220 = vpop.f32.mrb[0].mxu0
  %v1221 = vadd.f32 0.0, %v1220
  %v1222 = vpop.f32.mrb[0].mxu0
  %1223 = vmatprep.mubr.bf16.mxu0 0
  %1224 = vmatmul.mubr.bf16.gmra.mrb[0].mxu0 %v530
  %v1225 = vpop.f32.mrb[0].mxu0
  %v1226 = vadd.f32 0.0, %v1225
  %v1227 = vpop.f32.mrb[0].mxu0
  %v1228 = vpop.f32.mrb[0].mxu0
  %v1229 = vadd.f32 0.0, %v1228
  %v1230 = vpop.f32.mrb[0].mxu0
  %1231 = vmatprep.mubr.bf16.mxu0 0
  %1232 = vmatmul.mubr.bf16.gmra.mrb[0].mxu0 %v531
  %v1233 = vpop.f32.mrb[0].mxu0
  %v1234 = vadd.f32 0.0, %v1233
  %v1235 = vpop.f32.mrb[0].mxu0
  %v1236 = vpop.f32.mrb[0].mxu0
  %v1237 = vadd.f32 0.0, %v1236
  %v1238 = vpop.f32.mrb[0].mxu0
  %1239 = vmatprep.mubr.bf16.mxu0 0
  %1240 = vmatmul.mubr.bf16.gmra.mrb[0].mxu0 %v532
  %v1241 = vpop.f32.mrb[0].mxu0
  %v1242 = vadd.f32 0.0, %v1241
  %v1243 = vpop.f32.mrb[0].mxu0
  %v1244 = vpop.f32.mrb[0].mxu0
  %v1245 = vadd.f32 0.0, %v1244
  %v1246 = vpop.f32.mrb[0].mxu0
  %1247 = vmatprep.mubr.bf16.mxu0 0
  %1248 = vmatmul.mubr.bf16.gmra.mrb[0].mxu0 %v533
  %v1249 = vpop.f32.mrb[0].mxu0
  %v1250 = vadd.f32 0.0, %v1249
  %v1251 = vpop.f32.mrb[0].mxu0
  %v1252 = vpop.f32.mrb[0].mxu0
  %v1253 = vadd.f32 0.0, %v1252
  %v1254 = vpop.f32.mrb[0].mxu0
  %1255 = vmatprep.mubr.bf16.mxu0 0
  %1256 = vmatmul.mubr.bf16.gmra.mrb[0].mxu0 %v534
  %v1257 = vpop.f32.mrb[0].mxu0
  %v1258 = vadd.f32 0.0, %v1257
  %v1259 = vpop.f32.mrb[0].mxu0
  %v1260 = vpop.f32.mrb[0].mxu0
  %v1261 = vadd.f32 0.0, %v1260
  %v1262 = vpop.f32.mrb[0].mxu0
  %1263 = vdwg.mxu0
  %v1264 = vmax.f32 %v690, %v834
  %v1265 = vmax.f32 %v693, %v837
  %v1266 = vmax.f32 %v698, %v842
  %v1267 = vmax.f32 %v701, %v845
  %v1268 = vmax.f32 %v706, %v850
  %v1269 = vmax.f32 %v709, %v853
  %v1270 = vmax.f32 %v714, %v858
  %v1271 = vmax.f32 %v717, %v861
  %v1272 = vmax.f32 %v722, %v866
  %v1273 = vmax.f32 %v725, %v869
  %v1274 = vmax.f32 %v730, %v874
  %v1275 = vmax.f32 %v733, %v877
  %v1276 = vmax.f32 %v738, %v882
  %v1277 = vmax.f32 %v741, %v885
  %v1278 = vmax.f32 %v746, %v890
  %v1279 = vmax.f32 %v749, %v893
  %v1280 = vmax.f32 %v754, %v898
  %v1281 = vmax.f32 %v757, %v901
  %v1282 = vmax.f32 %v762, %v906
  %v1283 = vmax.f32 %v765, %v909
  %v1284 = vmax.f32 %v770, %v914
  %v1285 = vmax.f32 %v773, %v917
  %v1286 = vmax.f32 %v778, %v922
  %v1287 = vmax.f32 %v781, %v925
  %v1288 = vmax.f32 %v786, %v930
  %v1289 = vmax.f32 %v789, %v933
  %v1290 = vmax.f32 %v794, %v938
  %v1291 = vmax.f32 %v797, %v941
  %v1292 = vmax.f32 %v802, %v946
  %v1293 = vmax.f32 %v805, %v949
  %v1294 = vmax.f32 %v810, %v954
  %v1295 = vmax.f32 %v813, %v957
  %v1296 = vmax.f32 %v818, %v962
  %v1297 = vmax.f32 %v821, %v965
  %v1298 = vmax.f32 %v826, %v970
  %v1299 = vmax.f32 %v829, %v973
  %v1300 = vmax.f32 %v1264, %v978
  %v1301 = vmax.f32 %v1265, %v981
  %v1302 = vmax.f32 %v1266, %v986
  %v1303 = vmax.f32 %v1267, %v989
  %v1304 = vmax.f32 %v1268, %v994
  %v1305 = vmax.f32 %v1269, %v997
  %v1306 = vmax.f32 %v1270, %v1002
  %v1307 = vmax.f32 %v1271, %v1005
  %v1308 = vmax.f32 %v1272, %v1010
  %v1309 = vmax.f32 %v1273, %v1013
  %v1310 = vmax.f32 %v1274, %v1018
  %v1311 = vmax.f32 %v1275, %v1021
  %v1312 = vmax.f32 %v1276, %v1026
  %v1313 = vmax.f32 %v1277, %v1029
  %v1314 = vmax.f32 %v1278, %v1034
  %v1315 = vmax.f32 %v1279, %v1037
  %v1316 = vmax.f32 %v1280, %v1042
  %v1317 = vmax.f32 %v1281, %v1045
  %v1318 = vmax.f32 %v1282, %v1050
  %v1319 = vmax.f32 %v1283, %v1053
  %v1320 = vmax.f32 %v1284, %v1058
  %v1321 = vmax.f32 %v1285, %v1061
  %v1322 = vmax.f32 %v1286, %v1066
  %v1323 = vmax.f32 %v1287, %v1069
  %v1324 = vmax.f32 %v1288, %v1074
  %v1325 = vmax.f32 %v1289, %v1077
  %v1326 = vmax.f32 %v1290, %v1082
  %v1327 = vmax.f32 %v1291, %v1085
  %v1328 = vmax.f32 %v1292, %v1090
  %v1329 = vmax.f32 %v1293, %v1093
  %v1330 = vmax.f32 %v1294, %v1098
  %v1331 = vmax.f32 %v1295, %v1101
  %v1332 = vmax.f32 %v1296, %v1106
  %v1333 = vmax.f32 %v1297, %v1109
  %v1334 = vmax.f32 %v1298, %v1114
  %v1335 = vmax.f32 %v1299, %v1117
  %v1336 = vmax.f32 %v1300, %v1122
  %v1337 = vmax.f32 %v1301, %v1125
  %v1338 = vmax.f32 %v1302, %v1130
  %v1339 = vmax.f32 %v1303, %v1133
  %v1340 = vmax.f32 %v1304, %v1138
  %v1341 = vmax.f32 %v1305, %v1141
  %v1342 = vmax.f32 %v1306, %v1146
  %v1343 = vmax.f32 %v1307, %v1149
  %v1344 = vmax.f32 %v1308, %v1154
  %v1345 = vmax.f32 %v1309, %v1157
  %v1346 = vmax.f32 %v1310, %v1162
  %v1347 = vmax.f32 %v1311, %v1165
  %v1348 = vmax.f32 %v1312, %v1170
  %v1349 = vmax.f32 %v1313, %v1173
  %v1350 = vmax.f32 %v1314, %v1178
  %v1351 = vmax.f32 %v1315, %v1181
  %v1352 = vmax.f32 %v1316, %v1186
  %v1353 = vmax.f32 %v1317, %v1189
  %v1354 = vmax.f32 %v1318, %v1194
  %v1355 = vmax.f32 %v1319, %v1197
  %v1356 = vmax.f32 %v1320, %v1202
  %v1357 = vmax.f32 %v1321, %v1205
  %v1358 = vmax.f32 %v1322, %v1210
  %v1359 = vmax.f32 %v1323, %v1213
  %v1360 = vmax.f32 %v1324, %v1218
  %v1361 = vmax.f32 %v1325, %v1221
  %v1362 = vmax.f32 %v1326, %v1226
  %v1363 = vmax.f32 %v1327, %v1229
  %v1364 = vmax.f32 %v1328, %v1234
  %v1365 = vmax.f32 %v1329, %v1237
  %v1366 = vmax.f32 %v1330, %v1242
  %v1367 = vmax.f32 %v1331, %v1245
  %v1368 = vmax.f32 %v1332, %v1250
  %v1369 = vmax.f32 %v1333, %v1253
  %v1370 = vmax.f32 %v1334, %v1258
  %v1371 = vmax.f32 %v1335, %v1261
  %v1372 = vld [vmem:[%s2] sm:$0x1]
  %v1374 = vlaneseq
  %v1375 = vshrl.u32 %v1374, 7
  %v1376 = vsub.s32 0, %v1375
  %v1377 = vrot.slane %v1372, %v1376
  %v1379 = vadd.f32 %v1336, %v1377
  %v1380 = vadd.f32 %v1337, %v1377
  %v1381 = vadd.f32 %v1338, %v1377
  %v1382 = vadd.f32 %v1339, %v1377
  %v1383 = vadd.f32 %v1340, %v1377
  %v1384 = vadd.f32 %v1341, %v1377
  %v1385 = vadd.f32 %v1342, %v1377
  %v1386 = vadd.f32 %v1343, %v1377
  %v1387 = vadd.f32 %v1344, %v1377
  %v1388 = vadd.f32 %v1345, %v1377
  %v1389 = vadd.f32 %v1346, %v1377
  %v1390 = vadd.f32 %v1347, %v1377
  %v1391 = vadd.f32 %v1348, %v1377
  %v1392 = vadd.f32 %v1349, %v1377
  %v1393 = vadd.f32 %v1350, %v1377
  %v1394 = vadd.f32 %v1351, %v1377
  %v1395 = vadd.f32 %v1352, %v1377
  %v1396 = vadd.f32 %v1353, %v1377
  %v1397 = vadd.f32 %v1354, %v1377
  %v1398 = vadd.f32 %v1355, %v1377
  %v1399 = vadd.f32 %v1356, %v1377
  %v1400 = vadd.f32 %v1357, %v1377
  %v1401 = vadd.f32 %v1358, %v1377
  %v1402 = vadd.f32 %v1359, %v1377
  %v1403 = vadd.f32 %v1360, %v1377
  %v1404 = vadd.f32 %v1361, %v1377
  %v1405 = vadd.f32 %v1362, %v1377
  %v1406 = vadd.f32 %v1363, %v1377
  %v1407 = vadd.f32 %v1364, %v1377
  %v1408 = vadd.f32 %v1365, %v1377
  %v1409 = vadd.f32 %v1366, %v1377
  %v1410 = vadd.f32 %v1367, %v1377
  %v1411 = vadd.f32 %v1368, %v1377
  %v1412 = vadd.f32 %v1369, %v1377
  %v1413 = vadd.f32 %v1370, %v1377
  %v1414 = vadd.f32 %v1371, %v1377
  %v1415 = vmax.f32 %v1379, 0.0
  %v1416 = vmax.f32 %v1380, 0.0
  %v1417 = vmax.f32 %v1381, 0.0
  %v1418 = vmax.f32 %v1382, 0.0
  %v1419 = vmax.f32 %v1383, 0.0
  %v1420 = vmax.f32 %v1384, 0.0
  %v1421 = vmax.f32 %v1385, 0.0
  %v1422 = vmax.f32 %v1386, 0.0
  %v1423 = vmax.f32 %v1387, 0.0
  %v1424 = vmax.f32 %v1388, 0.0
  %v1425 = vmax.f32 %v1389, 0.0
  %v1426 = vmax.f32 %v1390, 0.0
  %v1427 = vmax.f32 %v1391, 0.0
  %v1428 = vmax.f32 %v1392, 0.0
  %v1429 = vmax.f32 %v1393, 0.0
  %v1430 = vmax.f32 %v1394, 0.0
  %v1431 = vmax.f32 %v1395, 0.0
  %v1432 = vmax.f32 %v1396, 0.0
  %v1433 = vmax.f32 %v1397, 0.0
  %v1434 = vmax.f32 %v1398, 0.0
  %v1435 = vmax.f32 %v1399, 0.0
  %v1436 = vmax.f32 %v1400, 0.0
  %v1437 = vmax.f32 %v1401, 0.0
  %v1438 = vmax.f32 %v1402, 0.0
  %v1439 = vmax.f32 %v1403, 0.0
  %v1440 = vmax.f32 %v1404, 0.0
  %v1441 = vmax.f32 %v1405, 0.0
  %v1442 = vmax.f32 %v1406, 0.0
  %v1443 = vmax.f32 %v1407, 0.0
  %v1444 = vmax.f32 %v1408, 0.0
  %v1445 = vmax.f32 %v1409, 0.0
  %v1446 = vmax.f32 %v1410, 0.0
  %v1447 = vmax.f32 %v1411, 0.0
  %v1448 = vmax.f32 %v1412, 0.0
  %v1449 = vmax.f32 %v1413, 0.0
  %v1450 = vmax.f32 %v1414, 0.0
  %v1451 = vpack.c.bf16 %v1416, %v1415
  %v1452 = vpack.c.bf16 %v1418, %v1417
  %v1453 = vpack.c.bf16 %v1420, %v1419
  %v1454 = vpack.c.bf16 %v1422, %v1421
  %v1455 = vpack.c.bf16 %v1424, %v1423
  %v1456 = vpack.c.bf16 %v1426, %v1425
  %v1457 = vpack.c.bf16 %v1428, %v1427
  %v1458 = vpack.c.bf16 %v1430, %v1429
  %v1459 = vpack.c.bf16 %v1432, %v1431
  %v1460 = vpack.c.bf16 %v1434, %v1433
  %v1461 = vpack.c.bf16 %v1436, %v1435
  %v1462 = vpack.c.bf16 %v1438, %v1437
  %v1463 = vpack.c.bf16 %v1440, %v1439
  %v1464 = vpack.c.bf16 %v1442, %v1441
  %v1465 = vpack.c.bf16 %v1444, %v1443
  %v1466 = vpack.c.bf16 %v1446, %v1445
  %v1467 = vpack.c.bf16 %v1448, %v1447
  %v1468 = vpack.c.bf16 %v1450, %v1449
  %v1487 = vunpack.c.l.b16 %v1451
  %v1488 = vunpack.c.h.b16 %v1451
  %v1489 = vunpack.c.l.b16 %v1452
  %v1490 = vunpack.c.h.b16 %v1452
  %v1491 = vunpack.c.l.b16 %v1453
  %v1492 = vunpack.c.h.b16 %v1453
  %v1493 = vunpack.c.l.b16 %v1454
  %v1494 = vunpack.c.h.b16 %v1454
  %v1495 = vunpack.c.l.b16 %v1455
  %v1496 = vunpack.c.h.b16 %v1455
  %v1497 = vunpack.c.l.b16 %v1456
  %v1498 = vunpack.c.h.b16 %v1456
  %v1499 = vunpack.c.l.b16 %v1457
  %v1500 = vunpack.c.h.b16 %v1457
  %v1501 = vunpack.c.l.b16 %v1458
  %v1502 = vunpack.c.h.b16 %v1458
  %v1503 = vunpack.c.l.b16 %v1459
  %v1504 = vunpack.c.h.b16 %v1459
  %v1505 = vunpack.c.l.b16 %v1460
  %v1506 = vunpack.c.h.b16 %v1460
  %v1507 = vunpack.c.l.b16 %v1461
  %v1508 = vunpack.c.h.b16 %v1461
  %v1509 = vunpack.c.l.b16 %v1462
  %v1510 = vunpack.c.h.b16 %v1462
  %v1511 = vunpack.c.l.b16 %v1463
  %v1512 = vunpack.c.h.b16 %v1463
  %v1513 = vunpack.c.l.b16 %v1464
  %v1514 = vunpack.c.h.b16 %v1464
  %v1515 = vunpack.c.l.b16 %v1465
  %v1516 = vunpack.c.h.b16 %v1465
  %v1517 = vunpack.c.l.b16 %v1466
  %v1518 = vunpack.c.h.b16 %v1466
  %v1519 = vunpack.c.l.b16 %v1467
  %v1520 = vunpack.c.h.b16 %v1467
  %v1521 = vunpack.c.l.b16 %v1468
  %v1522 = vunpack.c.h.b16 %v1468
  %v1523 = vpack.c.b16 %v1487, %v1487
  %v1524 = vpack.c.b16 %v1488, %v1488
  %v1525 = vpack.c.b16 %v1489, %v1489
  %v1526 = vpack.c.b16 %v1490, %v1490
  %v1527 = vpack.c.b16 %v1491, %v1491
  %v1528 = vpack.c.b16 %v1492, %v1492
  %v1529 = vpack.c.b16 %v1493, %v1493
  %v1530 = vpack.c.b16 %v1494, %v1494
  %v1531 = vpack.c.b16 %v1495, %v1495
  %v1532 = vpack.c.b16 %v1496, %v1496
  %v1533 = vpack.c.b16 %v1497, %v1497
  %v1534 = vpack.c.b16 %v1498, %v1498
  %v1535 = vpack.c.b16 %v1499, %v1499
  %v1536 = vpack.c.b16 %v1500, %v1500
  %v1537 = vpack.c.b16 %v1501, %v1501
  %v1538 = vpack.c.b16 %v1502, %v1502
  %v1539 = vpack.c.b16 %v1503, %v1503
  %v1540 = vpack.c.b16 %v1504, %v1504
  %v1541 = vpack.c.b16 %v1505, %v1505
  %v1542 = vpack.c.b16 %v1506, %v1506
  %v1543 = vpack.c.b16 %v1507, %v1507
  %v1544 = vpack.c.b16 %v1508, %v1508
  %v1545 = vpack.c.b16 %v1509, %v1509
  %v1546 = vpack.c.b16 %v1510, %v1510
  %v1547 = vpack.c.b16 %v1511, %v1511
  %v1548 = vpack.c.b16 %v1512, %v1512
  %v1549 = vpack.c.b16 %v1513, %v1513
  %v1550 = vpack.c.b16 %v1514, %v1514
  %v1551 = vpack.c.b16 %v1515, %v1515
  %v1552 = vpack.c.b16 %v1516, %v1516
  %v1553 = vpack.c.b16 %v1517, %v1517
  %v1554 = vpack.c.b16 %v1518, %v1518
  %v1555 = vpack.c.b16 %v1519, %v1519
  %v1556 = vpack.c.b16 %v1520, %v1520
  %v1557 = vpack.c.b16 %v1521, %v1521
  %v1558 = vpack.c.b16 %v1522, %v1522
  %1595 = vst [vmem:[%s3] sm:$0xf] %v1523
  %1596 = vst [vmem:[%s3 + $0x4] sm:$0xf] %v1524
  %1597 = vst [vmem:[%s3 + $0x8] sm:$0xf] %v1525
  %1598 = vst [vmem:[%s3 + $0xc] sm:$0xf] %v1526
  %1599 = vst [vmem:[%s3 + $0x10] sm:$0xf] %v1527
  %1600 = vst [vmem:[%s3 + $0x14] sm:$0xf] %v1528
  %1601 = vst [vmem:[%s3 + $0x18] sm:$0xf] %v1529
  %1602 = vst [vmem:[%s3 + $0x1c] sm:$0xf] %v1530
  %1603 = vst [vmem:[%s3 + $0x20] sm:$0xf] %v1531
  %1604 = vst [vmem:[%s3 + $0x24] sm:$0xf] %v1532
  %1605 = vst [vmem:[%s3 + $0x28] sm:$0xf] %v1533
  %1606 = vst [vmem:[%s3 + $0x2c] sm:$0xf] %v1534
  %1607 = vst [vmem:[%s3 + $0x30] sm:$0xf] %v1535
  %1608 = vst [vmem:[%s3 + $0x34] sm:$0xf] %v1536
  %1609 = vst [vmem:[%s3 + $0x38] sm:$0xf] %v1537
  %1610 = vst [vmem:[%s3 + $0x3c] sm:$0xf] %v1538
  %1611 = vst [vmem:[%s3 + $0x40] sm:$0xf] %v1539
  %1612 = vst [vmem:[%s3 + $0x44] sm:$0xf] %v1540
  %1613 = vst [vmem:[%s3 + $0x48] sm:$0xf] %v1541
  %1614 = vst [vmem:[%s3 + $0x4c] sm:$0xf] %v1542
  %1615 = vst [vmem:[%s3 + $0x50] sm:$0xf] %v1543
  %1616 = vst [vmem:[%s3 + $0x54] sm:$0xf] %v1544
  %1617 = vst [vmem:[%s3 + $0x58] sm:$0xf] %v1545
  %1618 = vst [vmem:[%s3 + $0x5c] sm:$0xf] %v1546
  %1619 = vst [vmem:[%s3 + $0x60] sm:$0xf] %v1547
  %1620 = vst [vmem:[%s3 + $0x64] sm:$0xf] %v1548
  %1621 = vst [vmem:[%s3 + $0x68] sm:$0xf] %v1549
  %1622 = vst [vmem:[%s3 + $0x6c] sm:$0xf] %v1550
  %1623 = vst [vmem:[%s3 + $0x70] sm:$0xf] %v1551
  %1624 = vst [vmem:[%s3 + $0x74] sm:$0xf] %v1552
  %1625 = vst [vmem:[%s3 + $0x78] sm:$0xf] %v1553
  %1626 = vst [vmem:[%s3 + $0x7c] sm:$0xf] %v1554
  %1627 = vst [vmem:[%s3 + $0x80] sm:$0xf] %v1555
  %1628 = vst [vmem:[%s3 + $0x84] sm:$0xf] %v1556
  %1629 = vst [vmem:[%s3 + $0x88] sm:$0xf] %v1557
  %1630 = vst [vmem:[%s3 + $0x8c] sm:$0xf] %v1558
  // Predicated region
  $region14: #{fjord_femnist_cnn2_forward.3} parent=0 // pred_check
    _
  $region15: #{fjord_femnist_cnn2_forward.3} parent=0 // pred_check_branch
    %1632 = sbr.rel (0) target = $region17
  $region16: #{fjord_femnist_cnn2_forward.3} parent=0 // pred_region
    _
  $region17: #{fjord_femnist_cnn2_forward.3} parent=0 // pred_fallthru
    _
  // Predicated region
  $region18: #{fjord_femnist_cnn2_forward.3} parent=0 // pred_check
    _
  $region19: #{fjord_femnist_cnn2_forward.3} parent=0 // pred_check_branch
    %1634 = sbr.rel (0) target = $region21
  $region20: #{fjord_femnist_cnn2_forward.3} parent=0 // pred_region
    _
  $region21: #{fjord_femnist_cnn2_forward.3} parent=0 // pred_fallthru
    _

// kernel: fjord_femnist_cnn2_forward.4
$region0: #{fjord_femnist_cnn2_forward.4}
  #allocation0 [shape = 'u32[]', space=smem, size = 0x4, offset = 0x4, fixed_abs, tag = 'smem constant byte address 0x4 - core index']
  #allocation1 [shape = 'u32[144,128]{1,0:T(1,128)}', space=vmem, size = 0x12000, scoped, tag = 'internal scratch']
  %s0 = inlined_call_operand.vmem [shape: bf16[4,32,256], index: 0, kind: input, shape index: {}]
  %s1 = inlined_call_operand.vmem [shape: bf16[256,128], index: 1, kind: input, shape index: {}]
  %s2 = inlined_call_operand.vmem [shape: f32[1,128], index: 2, kind: input, shape index: {}]
  %s3 = inlined_call_operand.vmem [shape: bf16[32,128], index: 3, kind: output, shape index: {}]
  %s4 = sld [smem:[#allocation0]]
  $region22: #{fjord_femnist_cnn2_forward.4} parent=0
    _
  %s6 = ssub.s32 1, %s4
  %s7 = scalar_select 0, %s6, %s4
  // Predicated region
  $region2: #{fjord_femnist_cnn2_forward.4} parent=0 // pred_check
    _
  $region3: #{fjord_femnist_cnn2_forward.4} parent=0 // pred_check_branch
    %9 = sbr.rel (0) target = $region5
  $region4: #{fjord_femnist_cnn2_forward.4} parent=0 // pred_region
    _
  $region5: #{fjord_femnist_cnn2_forward.4} parent=0 // pred_fallthru
    _
  // Predicated region
  $region6: #{fjord_femnist_cnn2_forward.4} parent=0 // pred_check
    _
  $region7: #{fjord_femnist_cnn2_forward.4} parent=0 // pred_check_branch
    %11 = sbr.rel (0) target = $region9
  $region8: #{fjord_femnist_cnn2_forward.4} parent=0 // pred_region
    _
  $region9: #{fjord_femnist_cnn2_forward.4} parent=0 // pred_fallthru
    _
  // Predicated region
  $region10: #{fjord_femnist_cnn2_forward.4} parent=0 // pred_check
    _
  $region11: #{fjord_femnist_cnn2_forward.4} parent=0 // pred_check_branch
    %13 = sbr.rel (0) target = $region13
  $region12: #{fjord_femnist_cnn2_forward.4} parent=0 // pred_region
    _
  $region13: #{fjord_femnist_cnn2_forward.4} parent=0 // pred_fallthru
    _
  %v15 = vld [vmem:[%s0] sm:$0xff]
  %v16 = vld [vmem:[%s0 + $0x8] sm:$0xff]
  %v17 = vld [vmem:[%s0 + $0x10] sm:$0xff]
  %v18 = vld [vmem:[%s0 + $0x18] sm:$0xff]
  %v19 = vld [vmem:[%s0 + $0x20] sm:$0xff]
  %v20 = vld [vmem:[%s0 + $0x28] sm:$0xff]
  %v21 = vld [vmem:[%s0 + $0x30] sm:$0xff]
  %v22 = vld [vmem:[%s0 + $0x38] sm:$0xff]
  %v23 = vld [vmem:[%s0 + $0x40] sm:$0xff]
  %v24 = vld [vmem:[%s0 + $0x48] sm:$0xff]
  %v25 = vld [vmem:[%s0 + $0x50] sm:$0xff]
  %v26 = vld [vmem:[%s0 + $0x58] sm:$0xff]
  %v27 = vld [vmem:[%s0 + $0x60] sm:$0xff]
  %v28 = vld [vmem:[%s0 + $0x68] sm:$0xff]
  %v29 = vld [vmem:[%s0 + $0x70] sm:$0xff]
  %v30 = vld [vmem:[%s0 + $0x78] sm:$0xff]
  %v31 = vld [vmem:[%s1] sm:$0xf]
  %v32 = vld [vmem:[%s1 + $0x4] sm:$0xf]
  %v33 = vld [vmem:[%s1 + $0x8] sm:$0xf]
  %v34 = vld [vmem:[%s1 + $0xc] sm:$0xf]
  %v35 = vld [vmem:[%s1 + $0x10] sm:$0xf]
  %v36 = vld [vmem:[%s1 + $0x14] sm:$0xf]
  %v37 = vld [vmem:[%s1 + $0x18] sm:$0xf]
  %v38 = vld [vmem:[%s1 + $0x1c] sm:$0xf]
  %v39 = vld [vmem:[%s1 + $0x20] sm:$0xf]
  %v40 = vld [vmem:[%s1 + $0x24] sm:$0xf]
  %v41 = vld [vmem:[%s1 + $0x28] sm:$0xf]
  %v42 = vld [vmem:[%s1 + $0x2c] sm:$0xf]
  %v43 = vld [vmem:[%s1 + $0x30] sm:$0xf]
  %v44 = vld [vmem:[%s1 + $0x34] sm:$0xf]
  %v45 = vld [vmem:[%s1 + $0x38] sm:$0xf]
  %v46 = vld [vmem:[%s1 + $0x3c] sm:$0xf]
  %v47 = vld [vmem:[%s1 + $0x40] sm:$0xf]
  %v48 = vld [vmem:[%s1 + $0x44] sm:$0xf]
  %v49 = vld [vmem:[%s1 + $0x48] sm:$0xf]
  %v50 = vld [vmem:[%s1 + $0x4c] sm:$0xf]
  %v51 = vld [vmem:[%s1 + $0x50] sm:$0xf]
  %v52 = vld [vmem:[%s1 + $0x54] sm:$0xf]
  %v53 = vld [vmem:[%s1 + $0x58] sm:$0xf]
  %v54 = vld [vmem:[%s1 + $0x5c] sm:$0xf]
  %v55 = vld [vmem:[%s1 + $0x60] sm:$0xf]
  %v56 = vld [vmem:[%s1 + $0x64] sm:$0xf]
  %v57 = vld [vmem:[%s1 + $0x68] sm:$0xf]
  %v58 = vld [vmem:[%s1 + $0x6c] sm:$0xf]
  %v59 = vld [vmem:[%s1 + $0x70] sm:$0xf]
  %v60 = vld [vmem:[%s1 + $0x74] sm:$0xf]
  %v61 = vld [vmem:[%s1 + $0x78] sm:$0xf]
  %v62 = vld [vmem:[%s1 + $0x7c] sm:$0xf]
  %v79 = vunpack.c.l.b16 %v15
  %v80 = vunpack.c.h.b16 %v15
  %v81 = vunpack.c.l.b16 %v16
  %v82 = vunpack.c.h.b16 %v16
  %v83 = vunpack.c.l.b16 %v17
  %v84 = vunpack.c.h.b16 %v17
  %v85 = vunpack.c.l.b16 %v18
  %v86 = vunpack.c.h.b16 %v18
  %v87 = vunpack.c.l.b16 %v19
  %v88 = vunpack.c.h.b16 %v19
  %v89 = vunpack.c.l.b16 %v20
  %v90 = vunpack.c.h.b16 %v20
  %v91 = vunpack.c.l.b16 %v21
  %v92 = vunpack.c.h.b16 %v21
  %v93 = vunpack.c.l.b16 %v22
  %v94 = vunpack.c.h.b16 %v22
  %v95 = vunpack.c.l.b16 %v23
  %v96 = vunpack.c.h.b16 %v23
  %v97 = vunpack.c.l.b16 %v24
  %v98 = vunpack.c.h.b16 %v24
  %v99 = vunpack.c.l.b16 %v25
  %v100 = vunpack.c.h.b16 %v25
  %v101 = vunpack.c.l.b16 %v26
  %v102 = vunpack.c.h.b16 %v26
  %v103 = vunpack.c.l.b16 %v27
  %v104 = vunpack.c.h.b16 %v27
  %v105 = vunpack.c.l.b16 %v28
  %v106 = vunpack.c.h.b16 %v28
  %v107 = vunpack.c.l.b16 %v29
  %v108 = vunpack.c.h.b16 %v29
  %v109 = vunpack.c.l.b16 %v30
  %v110 = vunpack.c.h.b16 %v30
  %v111 = vpack.c.b16 %v81, %v79
  %v112 = vpack.c.b16 %v82, %v80
  %v113 = vpack.c.b16 %v85, %v83
  %v114 = vpack.c.b16 %v86, %v84
  %v115 = vpack.c.b16 %v89, %v87
  %v116 = vpack.c.b16 %v90, %v88
  %v117 = vpack.c.b16 %v93, %v91
  %v118 = vpack.c.b16 %v94, %v92
  %v119 = vpack.c.b16 %v97, %v95
  %v120 = vpack.c.b16 %v98, %v96
  %v121 = vpack.c.b16 %v101, %v99
  %v122 = vpack.c.b16 %v102, %v100
  %v123 = vpack.c.b16 %v105, %v103
  %v124 = vpack.c.b16 %v106, %v104
  %v125 = vpack.c.b16 %v109, %v107
  %v126 = vpack.c.b16 %v110, %v108
  %v175 = vunpack.c.l.b16 %v31
  %v176 = vunpack.c.l.b16 %v32
  %v177 = vunpack.c.l.b16 %v33
  %v178 = vunpack.c.l.b16 %v34
  %v179 = vunpack.c.l.b16 %v35
  %v180 = vunpack.c.l.b16 %v36
  %v181 = vunpack.c.l.b16 %v37
  %v182 = vunpack.c.l.b16 %v38
  %v183 = vunpack.c.l.b16 %v39
  %v184 = vunpack.c.l.b16 %v40
  %v185 = vunpack.c.l.b16 %v41
  %v186 = vunpack.c.l.b16 %v42
  %v187 = vunpack.c.l.b16 %v43
  %v188 = vunpack.c.l.b16 %v44
  %v189 = vunpack.c.l.b16 %v45
  %v190 = vunpack.c.l.b16 %v46
  %v191 = vunpack.c.l.b16 %v47
  %v192 = vunpack.c.l.b16 %v48
  %v193 = vunpack.c.l.b16 %v49
  %v194 = vunpack.c.l.b16 %v50
  %v195 = vunpack.c.l.b16 %v51
  %v196 = vunpack.c.l.b16 %v52
  %v197 = vunpack.c.l.b16 %v53
  %v198 = vunpack.c.l.b16 %v54
  %v199 = vunpack.c.l.b16 %v55
  %v200 = vunpack.c.l.b16 %v56
  %v201 = vunpack.c.l.b16 %v57
  %v202 = vunpack.c.l.b16 %v58
  %v203 = vunpack.c.l.b16 %v59
  %v204 = vunpack.c.l.b16 %v60
  %v205 = vunpack.c.l.b16 %v61
  %v206 = vunpack.c.l.b16 %v62
  %v207 = vpack.c.b16 %v176, %v175
  %v208 = vpack.c.b16 %v178, %v177
  %v209 = vpack.c.b16 %v180, %v179
  %v210 = vpack.c.b16 %v182, %v181
  %v211 = vpack.c.b16 %v184, %v183
  %v212 = vpack.c.b16 %v186, %v185
  %v213 = vpack.c.b16 %v188, %v187
  %v214 = vpack.c.b16 %v190, %v189
  %v215 = vpack.c.b16 %v192, %v191
  %v216 = vpack.c.b16 %v194, %v193
  %v217 = vpack.c.b16 %v196, %v195
  %v218 = vpack.c.b16 %v198, %v197
  %v219 = vpack.c.b16 %v200, %v199
  %v220 = vpack.c.b16 %v202, %v201
  %v221 = vpack.c.b16 %v204, %v203
  %v222 = vpack.c.b16 %v206, %v205
  %239 = vmatprep.subr.bf16.mxu0 0
  %240 = vmatpush1.bf16.msra.mxu0 %v207
  %241 = vmatprep.subr.bf16.mxu0 0
  %242 = vmatpush1.bf16.msra.mxu0 %v208
  %243 = vmatprep.subr.bf16.mxu0 0
  %244 = vmatpush1.bf16.msra.mxu0 %v209
  %245 = vmatprep.subr.bf16.mxu0 0
  %246 = vmatpush1.bf16.msra.mxu0 %v210
  %247 = vmatprep.subr.bf16.mxu0 0
  %248 = vmatpush1.bf16.msra.mxu0 %v211
  %249 = vmatprep.subr.bf16.mxu0 0
  %250 = vmatpush1.bf16.msra.mxu0 %v212
  %251 = vmatprep.subr.bf16.mxu0 0
  %252 = vmatpush1.bf16.msra.mxu0 %v213
  %253 = vmatprep.subr.bf16.mxu0 0
  %254 = vmatpush1.bf16.msra.mxu0 %v214
  %255 = vmatprep.subr.bf16.mxu0 0
  %256 = vmatpush1.bf16.msra.mxu0 %v215
  %257 = vmatprep.subr.bf16.mxu0 0
  %258 = vmatpush1.bf16.msra.mxu0 %v216
  %259 = vmatprep.subr.bf16.mxu0 0
  %260 = vmatpush1.bf16.msra.mxu0 %v217
  %261 = vmatprep.subr.bf16.mxu0 0
  %262 = vmatpush1.bf16.msra.mxu0 %v218
  %263 = vmatprep.subr.bf16.mxu0 0
  %264 = vmatpush1.bf16.msra.mxu0 %v219
  %265 = vmatprep.subr.bf16.mxu0 0
  %266 = vmatpush1.bf16.msra.mxu0 %v220
  %267 = vmatprep.subr.bf16.mxu0 0
  %268 = vmatpush1.bf16.msra.mxu0 %v221
  %269 = vmatprep.subr.bf16.mxu0 0
  %270 = vmatpush1.bf16.msra.mxu0 %v222
  %271 = vmatprep.mubr.bf16.mxu0 %v112
  %272 = vmatmul.mubr.bf16.gmra.mrb[0].mxu0 %v111
  %v273 = vpop.f32.mrb[0].mxu0
  %v274 = vadd.f32 0.0, %v273
  %v275 = vpop.f32.mrb[0].mxu0
  %v276 = vpop.f32.mrb[0].mxu0
  %v277 = vadd.f32 0.0, %v276
  %v278 = vpop.f32.mrb[0].mxu0
  %279 = vmatprep.mubr.bf16.mxu0 %v114
  %280 = vmatmul.mubr.bf16.gmra.mrb[0].mxu0 %v113
  %v281 = vpop.f32.mrb[0].mxu0
  %v282 = vadd.f32 0.0, %v281
  %v283 = vpop.f32.mrb[0].mxu0
  %v284 = vpop.f32.mrb[0].mxu0
  %v285 = vadd.f32 0.0, %v284
  %v286 = vpop.f32.mrb[0].mxu0
  %287 = vmatprep.mubr.bf16.mxu0 %v116
  %288 = vmatmul.mubr.bf16.gmra.mrb[0].mxu0 %v115
  %v289 = vpop.f32.mrb[0].mxu0
  %v290 = vadd.f32 0.0, %v289
  %v291 = vpop.f32.mrb[0].mxu0
  %v292 = vpop.f32.mrb[0].mxu0
  %v293 = vadd.f32 0.0, %v292
  %v294 = vpop.f32.mrb[0].mxu0
  %295 = vmatprep.mubr.bf16.mxu0 %v118
  %296 = vmatmul.mubr.bf16.gmra.mrb[0].mxu0 %v117
  %v297 = vpop.f32.mrb[0].mxu0
  %v298 = vadd.f32 0.0, %v297
  %v299 = vpop.f32.mrb[0].mxu0
  %v300 = vpop.f32.mrb[0].mxu0
  %v301 = vadd.f32 0.0, %v300
  %v302 = vpop.f32.mrb[0].mxu0
  %303 = vmatprep.mubr.bf16.mxu0 %v120
  %304 = vmatmul.mubr.bf16.gmra.mrb[0].mxu0 %v119
  %v305 = vpop.f32.mrb[0].mxu0
  %v306 = vadd.f32 0.0, %v305
  %v307 = vpop.f32.mrb[0].mxu0
  %v308 = vpop.f32.mrb[0].mxu0
  %v309 = vadd.f32 0.0, %v308
  %v310 = vpop.f32.mrb[0].mxu0
  %311 = vmatprep.mubr.bf16.mxu0 %v122
  %312 = vmatmul.mubr.bf16.gmra.mrb[0].mxu0 %v121
  %v313 = vpop.f32.mrb[0].mxu0
  %v314 = vadd.f32 0.0, %v313
  %v315 = vpop.f32.mrb[0].mxu0
  %v316 = vpop.f32.mrb[0].mxu0
  %v317 = vadd.f32 0.0, %v316
  %v318 = vpop.f32.mrb[0].mxu0
  %319 = vmatprep.mubr.bf16.mxu0 %v124
  %320 = vmatmul.mubr.bf16.gmra.mrb[0].mxu0 %v123
  %v321 = vpop.f32.mrb[0].mxu0
  %v322 = vadd.f32 0.0, %v321
  %v323 = vpop.f32.mrb[0].mxu0
  %v324 = vpop.f32.mrb[0].mxu0
  %v325 = vadd.f32 0.0, %v324
  %v326 = vpop.f32.mrb[0].mxu0
  %327 = vmatprep.mubr.bf16.mxu0 %v126
  %328 = vmatmul.mubr.bf16.gmra.mrb[0].mxu0 %v125
  %v329 = vpop.f32.mrb[0].mxu0
  %v330 = vadd.f32 0.0, %v329
  %v331 = vpop.f32.mrb[0].mxu0
  %v332 = vpop.f32.mrb[0].mxu0
  %v333 = vadd.f32 0.0, %v332
  %v334 = vpop.f32.mrb[0].mxu0
  %335 = vdwg.mxu0
  %v336 = vmax.f32 %v274, %v290
  %v337 = vmax.f32 %v277, %v293
  %v338 = vmax.f32 %v282, %v298
  %v339 = vmax.f32 %v285, %v301
  %v340 = vmax.f32 %v336, %v306
  %v341 = vmax.f32 %v337, %v309
  %v342 = vmax.f32 %v338, %v314
  %v343 = vmax.f32 %v339, %v317
  %v344 = vmax.f32 %v340, %v322
  %v345 = vmax.f32 %v341, %v325
  %v346 = vmax.f32 %v342, %v330
  %v347 = vmax.f32 %v343, %v333
  %v348 = vld [vmem:[%s2] sm:$0x1]
  %v350 = vlaneseq
  %v351 = vshrl.u32 %v350, 7
  %v352 = vsub.s32 0, %v351
  %v353 = vrot.slane %v348, %v352
  %v355 = vadd.f32 %v344, %v353
  %v356 = vadd.f32 %v345, %v353
  %v357 = vadd.f32 %v346, %v353
  %v358 = vadd.f32 %v347, %v353
  %v359 = vmax.f32 %v355, 0.0
  %v360 = vmax.f32 %v356, 0.0
  %v361 = vmax.f32 %v357, 0.0
  %v362 = vmax.f32 %v358, 0.0
  %v363 = vpack.c.bf16 %v360, %v359
  %v364 = vpack.c.bf16 %v362, %v361
  %v367 = vunpack.c.l.b16 %v363
  %v368 = vunpack.c.h.b16 %v363
  %v369 = vunpack.c.l.b16 %v364
  %v370 = vunpack.c.h.b16 %v364
  %v371 = vpack.c.b16 %v367, %v367
  %v372 = vpack.c.b16 %v368, %v368
  %v373 = vpack.c.b16 %v369, %v369
  %v374 = vpack.c.b16 %v370, %v370
  %379 = vst [vmem:[%s3] sm:$0xf] %v371
  %380 = vst [vmem:[%s3 + $0x4] sm:$0xf] %v372
  %381 = vst [vmem:[%s3 + $0x8] sm:$0xf] %v373
  %382 = vst [vmem:[%s3 + $0xc] sm:$0xf] %v374
  // Predicated region
  $region14: #{fjord_femnist_cnn2_forward.4} parent=0 // pred_check
    _
  $region15: #{fjord_femnist_cnn2_forward.4} parent=0 // pred_check_branch
    %384 = sbr.rel (0) target = $region17
  $region16: #{fjord_femnist_cnn2_forward.4} parent=0 // pred_region
    _
  $region17: #{fjord_femnist_cnn2_forward.4} parent=0 // pred_fallthru
    _
  // Predicated region
  $region18: #{fjord_femnist_cnn2_forward.4} parent=0 // pred_check
    _
  $region19: #{fjord_femnist_cnn2_forward.4} parent=0 // pred_check_branch
    %386 = sbr.rel (0) target = $region21
  $region20: #{fjord_femnist_cnn2_forward.4} parent=0 // pred_region
    _
  $region21: #{fjord_femnist_cnn2_forward.4} parent=0 // pred_fallthru
    _

// kernel: fjord_femnist_cnn2_forward.5
$region0: #{fjord_femnist_cnn2_forward.5}
  #allocation0 [shape = 'u32[]', space=smem, size = 0x4, offset = 0x4, fixed_abs, tag = 'smem constant byte address 0x4 - core index']
  #allocation1 [shape = 'u32[144,128]{1,0:T(1,128)}', space=vmem, size = 0x12000, scoped, tag = 'internal scratch']
  %s0 = inlined_call_operand.vmem [shape: f32[8,384], index: 0, kind: input, shape index: {}]
  %s1 = inlined_call_operand.vmem [shape: f32[384,128], index: 1, kind: input, shape index: {}]
  %s2 = inlined_call_operand.vmem [shape: f32[1,128], index: 2, kind: input, shape index: {}]
  %s3 = inlined_call_operand.vmem [shape: f32[8,128], index: 3, kind: output, shape index: {}]
  %s4 = sld [smem:[#allocation0]]
  $region22: #{fjord_femnist_cnn2_forward.5} parent=0
    _
  %s6 = ssub.s32 1, %s4
  %s7 = scalar_select 0, %s6, %s4
  // Predicated region
  $region2: #{fjord_femnist_cnn2_forward.5} parent=0 // pred_check
    _
  $region3: #{fjord_femnist_cnn2_forward.5} parent=0 // pred_check_branch
    %9 = sbr.rel (0) target = $region5
  $region4: #{fjord_femnist_cnn2_forward.5} parent=0 // pred_region
    _
  $region5: #{fjord_femnist_cnn2_forward.5} parent=0 // pred_fallthru
    _
  // Predicated region
  $region6: #{fjord_femnist_cnn2_forward.5} parent=0 // pred_check
    _
  $region7: #{fjord_femnist_cnn2_forward.5} parent=0 // pred_check_branch
    %11 = sbr.rel (0) target = $region9
  $region8: #{fjord_femnist_cnn2_forward.5} parent=0 // pred_region
    _
  $region9: #{fjord_femnist_cnn2_forward.5} parent=0 // pred_fallthru
    _
  // Predicated region
  $region10: #{fjord_femnist_cnn2_forward.5} parent=0 // pred_check
    _
  $region11: #{fjord_femnist_cnn2_forward.5} parent=0 // pred_check_branch
    %13 = sbr.rel (0) target = $region13
  $region12: #{fjord_femnist_cnn2_forward.5} parent=0 // pred_region
    _
  $region13: #{fjord_femnist_cnn2_forward.5} parent=0 // pred_fallthru
    _
  %v14 = vld [vmem:[%s0] sm:$0xff]
  %v15 = vld [vmem:[%s0 + $0x8] sm:$0xff]
  %v16 = vld [vmem:[%s0 + $0x10] sm:$0xff]
  %v17 = vld [vmem:[%s1] sm:$0xff]
  %v18 = vld [vmem:[%s1 + $0x8] sm:$0xff]
  %v19 = vld [vmem:[%s1 + $0x10] sm:$0xff]
  %v20 = vld [vmem:[%s1 + $0x18] sm:$0xff]
  %v21 = vld [vmem:[%s1 + $0x20] sm:$0xff]
  %v22 = vld [vmem:[%s1 + $0x28] sm:$0xff]
  %v23 = vld [vmem:[%s1 + $0x30] sm:$0xff]
  %v24 = vld [vmem:[%s1 + $0x38] sm:$0xff]
  %v25 = vld [vmem:[%s1 + $0x40] sm:$0xff]
  %v26 = vld [vmem:[%s1 + $0x48] sm:$0xff]
  %v27 = vld [vmem:[%s1 + $0x50] sm:$0xff]
  %v28 = vld [vmem:[%s1 + $0x58] sm:$0xff]
  %v29 = vld [vmem:[%s1 + $0x60] sm:$0xff]
  %v30 = vld [vmem:[%s1 + $0x68] sm:$0xff]
  %v31 = vld [vmem:[%s1 + $0x70] sm:$0xff]
  %v32 = vld [vmem:[%s1 + $0x78] sm:$0xff]
  %v33 = vld [vmem:[%s1 + $0x80] sm:$0xff]
  %v34 = vld [vmem:[%s1 + $0x88] sm:$0xff]
  %v35 = vld [vmem:[%s1 + $0x90] sm:$0xff]
  %v36 = vld [vmem:[%s1 + $0x98] sm:$0xff]
  %v37 = vld [vmem:[%s1 + $0xa0] sm:$0xff]
  %v38 = vld [vmem:[%s1 + $0xa8] sm:$0xff]
  %v39 = vld [vmem:[%s1 + $0xb0] sm:$0xff]
  %v40 = vld [vmem:[%s1 + $0xb8] sm:$0xff]
  %v41 = vld [vmem:[%s1 + $0xc0] sm:$0xff]
  %v42 = vld [vmem:[%s1 + $0xc8] sm:$0xff]
  %v43 = vld [vmem:[%s1 + $0xd0] sm:$0xff]
  %v44 = vld [vmem:[%s1 + $0xd8] sm:$0xff]
  %v45 = vld [vmem:[%s1 + $0xe0] sm:$0xff]
  %v46 = vld [vmem:[%s1 + $0xe8] sm:$0xff]
  %v47 = vld [vmem:[%s1 + $0xf0] sm:$0xff]
  %v48 = vld [vmem:[%s1 + $0xf8] sm:$0xff]
  %v49 = vld [vmem:[%s1 + $0x100] sm:$0xff]
  %v50 = vld [vmem:[%s1 + $0x108] sm:$0xff]
  %v51 = vld [vmem:[%s1 + $0x110] sm:$0xff]
  %v52 = vld [vmem:[%s1 + $0x118] sm:$0xff]
  %v53 = vld [vmem:[%s1 + $0x120] sm:$0xff]
  %v54 = vld [vmem:[%s1 + $0x128] sm:$0xff]
  %v55 = vld [vmem:[%s1 + $0x130] sm:$0xff]
  %v56 = vld [vmem:[%s1 + $0x138] sm:$0xff]
  %v57 = vld [vmem:[%s1 + $0x140] sm:$0xff]
  %v58 = vld [vmem:[%s1 + $0x148] sm:$0xff]
  %v59 = vld [vmem:[%s1 + $0x150] sm:$0xff]
  %v60 = vld [vmem:[%s1 + $0x158] sm:$0xff]
  %v61 = vld [vmem:[%s1 + $0x160] sm:$0xff]
  %v62 = vld [vmem:[%s1 + $0x168] sm:$0xff]
  %v63 = vld [vmem:[%s1 + $0x170] sm:$0xff]
  %v64 = vld [vmem:[%s1 + $0x178] sm:$0xff]
  %v65 = vld [vmem:[%s2] sm:$0x1]
  %v67 = vlaneseq
  %v68 = vshrl.u32 %v67, 7
  %v69 = vsub.s32 0, %v68
  %v70 = vrot.slane %v65, %v69
  %72 = vmatprep.subr.mxu0 0.0
  %73 = vmatpush1.msra.mxu0 %v17
  %74 = vmatprep.subr.mxu0 0.0
  %75 = vmatpush1.msra.mxu0 %v18
  %76 = vmatprep.subr.mxu0 0.0
  %77 = vmatpush1.msra.mxu0 %v19
  %78 = vmatprep.subr.mxu0 0.0
  %79 = vmatpush1.msra.mxu0 %v20
  %80 = vmatprep.subr.mxu0 0.0
  %81 = vmatpush1.msra.mxu0 %v21
  %82 = vmatprep.subr.mxu0 0.0
  %83 = vmatpush1.msra.mxu0 %v22
  %84 = vmatprep.subr.mxu0 0.0
  %85 = vmatpush1.msra.mxu0 %v23
  %86 = vmatprep.subr.mxu0 0.0
  %87 = vmatpush1.msra.mxu0 %v24
  %88 = vmatprep.subr.mxu0 0.0
  %89 = vmatpush1.msra.mxu0 %v25
  %90 = vmatprep.subr.mxu0 0.0
  %91 = vmatpush1.msra.mxu0 %v26
  %92 = vmatprep.subr.mxu0 0.0
  %93 = vmatpush1.msra.mxu0 %v27
  %94 = vmatprep.subr.mxu0 0.0
  %95 = vmatpush1.msra.mxu0 %v28
  %96 = vmatprep.subr.mxu0 0.0
  %97 = vmatpush1.msra.mxu0 %v29
  %98 = vmatprep.subr.mxu0 0.0
  %99 = vmatpush1.msra.mxu0 %v30
  %100 = vmatprep.subr.mxu0 0.0
  %101 = vmatpush1.msra.mxu0 %v31
  %102 = vmatprep.subr.mxu0 0.0
  %103 = vmatpush1.msra.mxu0 %v32
  %104 = vmatprep.subr.mxu0 0.0
  %105 = vmatpush1.msra.mxu0 %v33
  %106 = vmatprep.subr.mxu0 0.0
  %107 = vmatpush1.msra.mxu0 %v34
  %108 = vmatprep.subr.mxu0 0.0
  %109 = vmatpush1.msra.mxu0 %v35
  %110 = vmatprep.subr.mxu0 0.0
  %111 = vmatpush1.msra.mxu0 %v36
  %112 = vmatprep.subr.mxu0 0.0
  %113 = vmatpush1.msra.mxu0 %v37
  %114 = vmatprep.subr.mxu0 0.0
  %115 = vmatpush1.msra.mxu0 %v38
  %116 = vmatprep.subr.mxu0 0.0
  %117 = vmatpush1.msra.mxu0 %v39
  %118 = vmatprep.subr.mxu0 0.0
  %119 = vmatpush1.msra.mxu0 %v40
  %120 = vmatprep.subr.mxu0 0.0
  %121 = vmatpush1.msra.mxu0 %v41
  %122 = vmatprep.subr.mxu0 0.0
  %123 = vmatpush1.msra.mxu0 %v42
  %124 = vmatprep.subr.mxu0 0.0
  %125 = vmatpush1.msra.mxu0 %v43
  %126 = vmatprep.subr.mxu0 0.0
  %127 = vmatpush1.msra.mxu0 %v44
  %128 = vmatprep.subr.mxu0 0.0
  %129 = vmatpush1.msra.mxu0 %v45
  %130 = vmatprep.subr.mxu0 0.0
  %131 = vmatpush1.msra.mxu0 %v46
  %132 = vmatprep.subr.mxu0 0.0
  %133 = vmatpush1.msra.mxu0 %v47
  %134 = vmatprep.subr.mxu0 0.0
  %135 = vmatpush1.msra.mxu0 %v48
  %136 = vmatprep.mubr.f32.mxu0 %v15
  %137 = vmatmul.mubr.f32.gmra.mrb[0].mxu0 %v14
  %v138 = vpop.f32.mrb[0].mxu0
  %v139 = vadd.f32 %v70, %v138
  %v140 = vpop.f32.mrb[0].mxu0
  %141 = vdwg.mxu0
  %142 = vmatprep.subr.mxu0 0.0
  %143 = vmatpush1.msra.mxu0 %v49
  %144 = vmatprep.subr.mxu0 0.0
  %145 = vmatpush1.msra.mxu0 %v50
  %146 = vmatprep.subr.mxu0 0.0
  %147 = vmatpush1.msra.mxu0 %v51
  %148 = vmatprep.subr.mxu0 0.0
  %149 = vmatpush1.msra.mxu0 %v52
  %150 = vmatprep.subr.mxu0 0.0
  %151 = vmatpush1.msra.mxu0 %v53
  %152 = vmatprep.subr.mxu0 0.0
  %153 = vmatpush1.msra.mxu0 %v54
  %154 = vmatprep.subr.mxu0 0.0
  %155 = vmatpush1.msra.mxu0 %v55
  %156 = vmatprep.subr.mxu0 0.0
  %157 = vmatpush1.msra.mxu0 %v56
  %158 = vmatprep.subr.mxu0 0.0
  %159 = vmatpush1.msra.mxu0 %v57
  %160 = vmatprep.subr.mxu0 0.0
  %161 = vmatpush1.msra.mxu0 %v58
  %162 = vmatprep.subr.mxu0 0.0
  %163 = vmatpush1.msra.mxu0 %v59
  %164 = vmatprep.subr.mxu0 0.0
  %165 = vmatpush1.msra.mxu0 %v60
  %166 = vmatprep.subr.mxu0 0.0
  %167 = vmatpush1.msra.mxu0 %v61
  %168 = vmatprep.subr.mxu0 0.0
  %169 = vmatpush1.msra.mxu0 %v62
  %170 = vmatprep.subr.mxu0 0.0
  %171 = vmatpush1.msra.mxu0 %v63
  %172 = vmatprep.subr.mxu0 0.0
  %173 = vmatpush1.msra.mxu0 %v64
  %174 = vmatprep.subr.mxu0 0.0
  %175 = vmatpush1.msra.mxu0 0.0
  %176 = vmatprep.subr.mxu0 0.0
  %177 = vmatpush1.msra.mxu0 0.0
  %178 = vmatprep.subr.mxu0 0.0
  %179 = vmatpush1.msra.mxu0 0.0
  %180 = vmatprep.subr.mxu0 0.0
  %181 = vmatpush1.msra.mxu0 0.0
  %182 = vmatprep.subr.mxu0 0.0
  %183 = vmatpush1.msra.mxu0 0.0
  %184 = vmatprep.subr.mxu0 0.0
  %185 = vmatpush1.msra.mxu0 0.0
  %186 = vmatprep.subr.mxu0 0.0
  %187 = vmatpush1.msra.mxu0 0.0
  %188 = vmatprep.subr.mxu0 0.0
  %189 = vmatpush1.msra.mxu0 0.0
  %190 = vmatprep.subr.mxu0 0.0
  %191 = vmatpush1.msra.mxu0 0.0
  %192 = vmatprep.subr.mxu0 0.0
  %193 = vmatpush1.msra.mxu0 0.0
  %194 = vmatprep.subr.mxu0 0.0
  %195 = vmatpush1.msra.mxu0 0.0
  %196 = vmatprep.subr.mxu0 0.0
  %197 = vmatpush1.msra.mxu0 0.0
  %198 = vmatprep.subr.mxu0 0.0
  %199 = vmatpush1.msra.mxu0 0.0
  %200 = vmatprep.subr.mxu0 0.0
  %201 = vmatpush1.msra.mxu0 0.0
  %202 = vmatprep.subr.mxu0 0.0
  %203 = vmatpush1.msra.mxu0 0.0
  %204 = vmatprep.subr.mxu0 0.0
  %205 = vmatpush1.msra.mxu0 0.0
  %206 = vmatprep.mubr.f32.mxu0 0.0
  %207 = vmatmul.mubr.f32.gmra.mrb[0].mxu0 %v16
  %v208 = vpop.f32.mrb[0].mxu0
  %v209 = vadd.f32 %v139, %v208
  %v210 = vpop.f32.mrb[0].mxu0
  %211 = vdwg.mxu0
  %212 = vst [vmem:[%s3] sm:$0xff] %v209
  // Predicated region
  $region14: #{fjord_femnist_cnn2_forward.5} parent=0 // pred_check
    _
  $region15: #{fjord_femnist_cnn2_forward.5} parent=0 // pred_check_branch
    %214 = sbr.rel (0) target = $region17
  $region16: #{fjord_femnist_cnn2_forward.5} parent=0 // pred_region
    _
  $region17: #{fjord_femnist_cnn2_forward.5} parent=0 // pred_fallthru
    _
  // Predicated region
  $region18: #{fjord_femnist_cnn2_forward.5} parent=0 // pred_check
    _
  $region19: #{fjord_femnist_cnn2_forward.5} parent=0 // pred_check_branch
    %216 = sbr.rel (0) target = $region21
  $region20: #{fjord_femnist_cnn2_forward.5} parent=0 // pred_region
    _
  $region21: #{fjord_femnist_cnn2_forward.5} parent=0 // pred_fallthru
    _

</llo_original>
